<compile_context>
chip_gen: v7x
topology: tpu7x:2x2x1
jax: 0.10.0
libtpu: 0.0.40
codegen_flags: <defaults>
</compile_context>

<pallas_src>
import functools

import jax
import jax.numpy as jnp
from jax.experimental import pallas as pl
from jax.experimental.pallas import tpu as pltpu


def _round_up(x, m):
    return ((x + m - 1) // m) * m


def _dot(x_bf16, w_ref):
    # bf16 x bf16 MXU path, f32 accumulation.
    return jnp.dot(x_bf16, w_ref[...], preferred_element_type=jnp.float32)


def _actor_std_kernel(lo, hi,
                      state_ref,
                      w1_ref, b1_ref, w2_ref, b2_ref,
                      w3a_ref, b3_ref, w4_ref, b4_ref,
                      out_ref):
    x = state_ref[...].astype(jnp.bfloat16)                                # (TB, S)
    # bias-add / activation in f32, single cast to bf16 feeding the next MXU pass
    h1 = jnp.maximum(_dot(x, w1_ref) + b1_ref[...], 0.0).astype(jnp.bfloat16)   # (TB, 512)
    h2 = jnp.maximum(_dot(h1, w2_ref) + b2_ref[...], 0.0).astype(jnp.bfloat16)  # (TB, 384)
    h3 = jax.nn.sigmoid(_dot(h2, w3a_ref) + b3_ref[...]).astype(jnp.bfloat16)   # (TB, 128)
    z4 = _dot(h3, w4_ref) + b4_ref[...]                                         # (TB, A_pad)
    out_ref[...] = jax.nn.sigmoid(z4) * (hi - lo) + lo


def _actor_ent_kernel(lo, hi, s_dim,
                      xr_ref,
                      w1_ref, b1_ref, w2_ref, b2_ref,
                      w3a_ref, w3b_ref, b3_ref, w4_ref, b4_ref,
                      out_ref):
    xr = xr_ref[...]                                                       # (TB, S+R)
    x = xr[:, :s_dim].astype(jnp.bfloat16)
    r = xr[:, s_dim:].astype(jnp.bfloat16)
    h1 = jnp.maximum(_dot(x, w1_ref) + b1_ref[...], 0.0).astype(jnp.bfloat16)
    h2 = jnp.maximum(_dot(h1, w2_ref) + b2_ref[...], 0.0).astype(jnp.bfloat16)
    # concat([h2, rand], 1) @ W3 == h2 @ W3[:300] + rand @ W3[300:]
    z3 = _dot(h2, w3a_ref) + _dot(r, w3b_ref) + b3_ref[...]
    h3 = jax.nn.sigmoid(z3).astype(jnp.bfloat16)
    z4 = _dot(h3, w4_ref) + b4_ref[...]
    out_ref[...] = jax.nn.sigmoid(z4) * (hi - lo) + lo


def actor_forward(state, params, action_range, action_dim,
                  rand_var=None, block_b=2048):
    """Actor forward pass as a single batch-tiled Pallas TPU kernel.

    state:    (B, S) or (S,) float32
    rand_var: None for mode='Std' (specialized zero-rand kernel),
              else (B, rand_var_dim) float32 for mode='Ent' (noise generated
              host-side with jax.random; pre-concatenated onto `state`).
    """
    if state.ndim == 1:
        state = state[None, :]
    lo, hi = float(action_range[0]), float(action_range[1])
    B, S = state.shape
    h1p = params["w1"].shape[1]
    h2p = params["w2"].shape[1]
    h3p = params["w3a"].shape[1]
    Ap = params["w4"].shape[1]

    # Ent mode: single lane-dense batch input (state ++ rand), no separate rand DMA.
    # TODO(synk): alternatively seed pltpu.prng_* in-kernel to avoid host-side noise.
    if rand_var is not None:
        x_in = jnp.concatenate([state, rand_var.astype(state.dtype)], axis=1)
    else:
        x_in = state
    in_w = x_in.shape[1]

    # ---- batch tiling: guarantee >=2 grid steps for mid/large batches so the
    # "parallel" axis shards across v7x's two TensorCores; tiles stay 8-multiples.
    B8 = _round_up(B, 8)
    if B8 > block_b:
        TB = block_b                               # many pipelined steps
    elif B8 >= 256:
        TB = _round_up((B8 + 1) // 2, 8)           # exactly 2 steps
    else:
        TB = B8                                    # tiny batch: one overhead-bound tile
    Bp = _round_up(B8, TB)
    if Bp != B:
        x_in = jnp.pad(x_in, ((0, Bp - B), (0, 0)))
    nb = Bp // TB

    tile_spec = pl.BlockSpec((TB, in_w), lambda i: (i, 0))

    def pinned_spec(arr, mode):                    # weights/biases: VMEM-resident
        if mode is None:
            return pl.BlockSpec(arr.shape, lambda i: (0, 0))
        return pl.BlockSpec(arr.shape, lambda i: (0, 0), pipeline_mode=mode)

    if rand_var is None:
        kernel = functools.partial(_actor_std_kernel, lo, hi)
        weights = (params["w1"], params["b1"], params["w2"], params["b2"],
                   params["w3a"], params["b3"], params["w4"], params["b4"])
    else:
        kernel = functools.partial(_actor_ent_kernel, lo, hi, S)
        weights = (params["w1"], params["b1"], params["w2"], params["b2"],
                   params["w3a"], params["w3b"], params["b3"],
                   params["w4"], params["b4"])
    operands = (x_in,) + weights

    # ---- advisory cost model ------------------------------------------------
    flops = 2 * Bp * (S * h1p + h1p * h2p + h2p * h3p + h3p * Ap)
    if rand_var is not None:
        flops += 2 * Bp * params["w3b"].shape[0] * h3p
    weight_bytes = sum(int(a.size) * a.dtype.itemsize for a in weights)
    cost = pl.CostEstimate(
        flops=int(flops),
        transcendentals=int(Bp * (h3p + Ap)),
        bytes_accessed=int(Bp * (in_w + Ap) * 4 + weight_bytes))

    # VMEM budget scales with tile rows; stays under v7x's 64 MiB/TC physical VMEM
    # and above v5e's 16 MiB default scoped limit.
    vmem_limit = int(min(64 * 2**20, 16 * 2**20 + TB * 12 * 1024))

    def run(pinned_mode):
        return pl.pallas_call(
            kernel,
            out_shape=jax.ShapeDtypeStruct((Bp, Ap), jnp.float32),
            grid=(nb,),
            in_specs=[tile_spec] + [pinned_spec(a, pinned_mode) for a in weights],
            out_specs=pl.BlockSpec((TB, Ap), lambda i: (i, 0)),
            compiler_params=pltpu.CompilerParams(
                dimension_semantics=("parallel",),
                vmem_limit_bytes=vmem_limit),
            cost_estimate=cost,
        )(*operands)

    try:
        out = run(pl.Buffered(1))      # single-buffer the pinned weights (no dead copy)
    except Exception:                  # pragma: no cover - fall back if unsupported
        out = run(None)

    return out[:B, :action_dim]


def init_actor_params(key, state_dim, action_dim, rand_var_dim=16,
                      hidden_state=(400, 300), hidden_rand=(100,)):
    """Synthetic params (uniform +-1/sqrt(fan_in)), zero-padded to lane-friendly
    sizes (400->512, 300->384, 100->128, A->128). Weights bf16, biases f32."""
    h1, h2 = hidden_state
    h3 = hidden_rand[0]
    h1p, h2p, h3p = _round_up(h1, 128), _round_up(h2, 128), _round_up(h3, 128)
    ap = _round_up(action_dim, 128)

    def linear(k, fan_in, fan_out, fin_pad, fout_pad):
        kw, kb = jax.random.split(k)
        bound = float(fan_in) ** -0.5
        w = jax.random.uniform(kw, (fan_in, fan_out), jnp.float32, -bound, bound)
        b = jax.random.uniform(kb, (1, fan_out), jnp.float32, -bound, bound)
        wp = jnp.zeros((fin_pad, fout_pad), jnp.float32).at[:fan_in, :fan_out].set(w)
        bp = jnp.zeros((1, fout_pad), jnp.float32).at[:, :fan_out].set(b)
        return wp.astype(jnp.bfloat16), bp

    k1, k2, k3a, k3b, k3bias, k4 = jax.random.split(key, 6)
    w1, b1 = linear(k1, state_dim, h1, state_dim, h1p)
    w2, b2 = linear(k2, h1, h2, h1p, h2p)
    # layer 3 logically has fan_in = h2 + rand_var_dim, split row-wise
    bound3 = float(h2 + rand_var_dim) ** -0.5
    w3a = jax.random.uniform(k3a, (h2, h3), jnp.float32, -bound3, bound3)
    w3b = jax.random.uniform(k3b, (rand_var_dim, h3), jnp.float32, -bound3, bound3)
    b3 = jax.random.uniform(k3bias, (1, h3), jnp.float32, -bound3, bound3)
    w3a_p = jnp.zeros((h2p, h3p), jnp.float32).at[:h2, :h3].set(w3a).astype(jnp.bfloat16)
    w3b_p = jnp.zeros((rand_var_dim, h3p), jnp.float32).at[:, :h3].set(w3b).astype(jnp.bfloat16)
    b3_p = jnp.zeros((1, h3p), jnp.float32).at[:, :h3].set(b3)
    w4, b4 = linear(k4, h3, action_dim, h3p, ap)
    return {"w1": w1, "b1": b1, "w2": w2, "b2": b2,
            "w3a": w3a_p, "w3b": w3b_p, "b3": b3_p, "w4": w4, "b4": b4}


def reference_forward(state, rand_var, params, action_range, action_dim):
    """Pure-JAX reference using the same padded bf16 weights / f32 math."""
    lo, hi = float(action_range[0]), float(action_range[1])

    def dot(a, w):
        return jnp.dot(a.astype(jnp.bfloat16), w, preferred_element_type=jnp.float32)

    h1 = jax.nn.relu(dot(state, params["w1"]) + params["b1"])
    h2 = jax.nn.relu(dot(h1, params["w2"]) + params["b2"])
    z3 = dot(h2, params["w3a"]) + params["b3"]
    if rand_var is not None:
        z3 = z3 + dot(rand_var, params["w3b"])
    h3 = jax.nn.sigmoid(z3)
    a = jax.nn.sigmoid(dot(h3, params["w4"]) + params["b4"])
    return (a * (hi - lo) + lo)[:, :action_dim]


if __name__ == "__main__":
    key = jax.random.PRNGKey(0)
    k_params, k_state, k_rand, k_state2, k_state3 = jax.random.split(key, 5)

    batch = 2
    state_dim = 8
    action_dim = 4
    rand_var_dim = 16
    action_range = (-2.0, 2.0)

    params = init_actor_params(k_params, state_dim, action_dim, rand_var_dim)
    state = jax.random.normal(k_state, (batch, state_dim), jnp.float32)

    # ---- mode='Std' (specialized zero-rand kernel) ----
    act_std = jax.block_until_ready(
        actor_forward(state, params, action_range, action_dim))
    ref_std = reference_forward(state, None, params, action_range, action_dim)
    assert act_std.shape == (batch, action_dim)
    assert jnp.allclose(act_std, ref_std, atol=1e-4, rtol=1e-4)

    # ---- mode='Ent' (noise drawn host-side, pre-concatenated onto state) ----
    rand_var = jax.random.normal(k_rand, (batch, rand_var_dim), jnp.float32)
    act_ent = jax.block_until_ready(
        actor_forward(state, params, action_range, action_dim, rand_var=rand_var))
    ref_ent = reference_forward(state, rand_var, params, action_range, action_dim)
    assert act_ent.shape == (batch, action_dim)
    assert jnp.allclose(act_ent, ref_ent, atol=1e-4, rtol=1e-4)

    # ---- ragged batch exercising the batch grid with a tiny tile (TB=8, nb=3) ----
    state_big = jax.random.normal(k_state2, (20, state_dim), jnp.float32)
    act_big = jax.block_until_ready(
        actor_forward(state_big, params, action_range, action_dim, block_b=8))
    ref_big = reference_forward(state_big, None, params, action_range, action_dim)
    assert act_big.shape == (20, action_dim)
    assert jnp.allclose(act_big, ref_big, atol=1e-4, rtol=1e-4)

    # ---- mid-size batch: auto-split into 2 grid steps (both v7x TensorCores) ----
    state_mid = jax.random.normal(k_state3, (512, state_dim), jnp.float32)
    act_mid = jax.block_until_ready(
        actor_forward(state_mid, params, action_range, action_dim))
    ref_mid = reference_forward(state_mid, None, params, action_range, action_dim)
    assert act_mid.shape == (512, action_dim)
    assert jnp.allclose(act_mid, ref_mid, atol=1e-4, rtol=1e-4)

    print("KERNEL_OK")
</pallas_src>

<mosaic_0001>
module attributes {stable_mosaic.version = 11 : i64} {
  func.func @_actor_std_kernel(%arg0: i32, %arg1: memref<8x8xf32, #tpu.memory_space<vmem>>, %arg2: memref<8x512xbf16, #tpu.memory_space<vmem>>, %arg3: memref<1x512xf32, #tpu.memory_space<vmem>>, %arg4: memref<512x384xbf16, #tpu.memory_space<vmem>>, %arg5: memref<1x384xf32, #tpu.memory_space<vmem>>, %arg6: memref<384x128xbf16, #tpu.memory_space<vmem>>, %arg7: memref<1x128xf32, #tpu.memory_space<vmem>>, %arg8: memref<128x128xbf16, #tpu.memory_space<vmem>>, %arg9: memref<1x128xf32, #tpu.memory_space<vmem>>, %arg10: memref<8x128xf32, #tpu.memory_space<vmem>>) attributes {dimension_semantics = [#tpu.dimension_semantics<parallel>], iteration_bounds = array<i64: 1>, scalar_prefetch = 0 : i64, scratch_operands = 0 : i64, tpu.core_type = #tpu.core_type<tc>, window_params = [{transform_indices = @transform_0, window_bounds = array<i64: 8, 8>}, {pipeline_mode = #tpu.pipeline_mode<synchronous>, transform_indices = @transform_1, window_bounds = array<i64: 8, 512>}, {pipeline_mode = #tpu.pipeline_mode<synchronous>, transform_indices = @transform_2, window_bounds = array<i64: 1, 512>}, {pipeline_mode = #tpu.pipeline_mode<synchronous>, transform_indices = @transform_3, window_bounds = array<i64: 512, 384>}, {pipeline_mode = #tpu.pipeline_mode<synchronous>, transform_indices = @transform_4, window_bounds = array<i64: 1, 384>}, {pipeline_mode = #tpu.pipeline_mode<synchronous>, transform_indices = @transform_5, window_bounds = array<i64: 384, 128>}, {pipeline_mode = #tpu.pipeline_mode<synchronous>, transform_indices = @transform_6, window_bounds = array<i64: 1, 128>}, {pipeline_mode = #tpu.pipeline_mode<synchronous>, transform_indices = @transform_7, window_bounds = array<i64: 128, 128>}, {pipeline_mode = #tpu.pipeline_mode<synchronous>, transform_indices = @transform_8, window_bounds = array<i64: 1, 128>}, {transform_indices = @transform_9, window_bounds = array<i64: 8, 128>}]} {
    %c0 = arith.constant 0 : index
    %c0_0 = arith.constant 0 : index
    %0 = vector.load %arg1[%c0, %c0_0] : memref<8x8xf32, #tpu.memory_space<vmem>>, vector<8x8xf32>
    %1 = arith.truncf %0 : vector<8x8xf32> to vector<8x8xbf16>
    %c0_1 = arith.constant 0 : index
    %c0_2 = arith.constant 0 : index
    %2 = vector.load %arg2[%c0_1, %c0_2] : memref<8x512xbf16, #tpu.memory_space<vmem>>, vector<8x512xbf16>
    %cst = arith.constant dense<0.000000e+00> : vector<8x512xf32>
    %3 = tpu.matmul %1, %2, %cst {dimension_numbers = #tpu.dot_dimension_numbers<[1], [0], [0], [1], [0, 0, 1, 1], [], []>} : vector<8x8xbf16>, vector<8x512xbf16>, vector<8x512xf32> -> vector<8x512xf32>
    %c0_3 = arith.constant 0 : index
    %c0_4 = arith.constant 0 : index
    %4 = vector.load %arg3[%c0_3, %c0_4] : memref<1x512xf32, #tpu.memory_space<vmem>>, vector<1x512xf32>
    %5 = vector.broadcast %4 : vector<1x512xf32> to vector<8x512xf32>
    %6 = arith.addf %3, %5 : vector<8x512xf32>
    %cst_5 = arith.constant 0.000000e+00 : f32
    %7 = vector.broadcast %cst_5 : f32 to vector<8x512xf32>
    %8 = arith.maximumf %6, %7 : vector<8x512xf32>
    %9 = arith.truncf %8 : vector<8x512xf32> to vector<8x512xbf16>
    %c0_6 = arith.constant 0 : index
    %c0_7 = arith.constant 0 : index
    %10 = vector.load %arg4[%c0_6, %c0_7] : memref<512x384xbf16, #tpu.memory_space<vmem>>, vector<512x384xbf16>
    %cst_8 = arith.constant dense<0.000000e+00> : vector<8x384xf32>
    %11 = tpu.matmul %9, %10, %cst_8 {dimension_numbers = #tpu.dot_dimension_numbers<[1], [0], [0], [1], [0, 0, 1, 1], [], []>} : vector<8x512xbf16>, vector<512x384xbf16>, vector<8x384xf32> -> vector<8x384xf32>
    %c0_9 = arith.constant 0 : index
    %c0_10 = arith.constant 0 : index
    %12 = vector.load %arg5[%c0_9, %c0_10] : memref<1x384xf32, #tpu.memory_space<vmem>>, vector<1x384xf32>
    %13 = vector.broadcast %12 : vector<1x384xf32> to vector<8x384xf32>
    %14 = arith.addf %11, %13 : vector<8x384xf32>
    %cst_11 = arith.constant 0.000000e+00 : f32
    %15 = vector.broadcast %cst_11 : f32 to vector<8x384xf32>
    %16 = arith.maximumf %14, %15 : vector<8x384xf32>
    %17 = arith.truncf %16 : vector<8x384xf32> to vector<8x384xbf16>
    %c0_12 = arith.constant 0 : index
    %c0_13 = arith.constant 0 : index
    %18 = vector.load %arg6[%c0_12, %c0_13] : memref<384x128xbf16, #tpu.memory_space<vmem>>, vector<384x128xbf16>
    %cst_14 = arith.constant dense<0.000000e+00> : vector<8x128xf32>
    %19 = tpu.matmul %17, %18, %cst_14 {dimension_numbers = #tpu.dot_dimension_numbers<[1], [0], [0], [1], [0, 0, 1, 1], [], []>} : vector<8x384xbf16>, vector<384x128xbf16>, vector<8x128xf32> -> vector<8x128xf32>
    %c0_15 = arith.constant 0 : index
    %c0_16 = arith.constant 0 : index
    %20 = vector.load %arg7[%c0_15, %c0_16] : memref<1x128xf32, #tpu.memory_space<vmem>>, vector<1x128xf32>
    %21 = vector.broadcast %20 : vector<1x128xf32> to vector<8x128xf32>
    %22 = arith.addf %19, %21 : vector<8x128xf32>
    %23 = arith.negf %22 : vector<8x128xf32>
    %24 = math.exp %23 : vector<8x128xf32>
    %cst_17 = arith.constant 1.000000e+00 : f32
    %25 = vector.broadcast %cst_17 : f32 to vector<8x128xf32>
    %26 = arith.addf %25, %24 : vector<8x128xf32>
    %27 = arith.divf %25, %26 : vector<8x128xf32>
    %28 = arith.truncf %27 : vector<8x128xf32> to vector<8x128xbf16>
    %c0_18 = arith.constant 0 : index
    %c0_19 = arith.constant 0 : index
    %29 = vector.load %arg8[%c0_18, %c0_19] : memref<128x128xbf16, #tpu.memory_space<vmem>>, vector<128x128xbf16>
    %cst_20 = arith.constant dense<0.000000e+00> : vector<8x128xf32>
    %30 = tpu.matmul %28, %29, %cst_20 {dimension_numbers = #tpu.dot_dimension_numbers<[1], [0], [0], [1], [0, 0, 1, 1], [], []>} : vector<8x128xbf16>, vector<128x128xbf16>, vector<8x128xf32> -> vector<8x128xf32>
    %c0_21 = arith.constant 0 : index
    %c0_22 = arith.constant 0 : index
    %31 = vector.load %arg9[%c0_21, %c0_22] : memref<1x128xf32, #tpu.memory_space<vmem>>, vector<1x128xf32>
    %32 = vector.broadcast %31 : vector<1x128xf32> to vector<8x128xf32>
    %33 = arith.addf %30, %32 : vector<8x128xf32>
    %34 = arith.negf %33 : vector<8x128xf32>
    %35 = math.exp %34 : vector<8x128xf32>
    %cst_23 = arith.constant 1.000000e+00 : f32
    %36 = vector.broadcast %cst_23 : f32 to vector<8x128xf32>
    %37 = arith.addf %36, %35 : vector<8x128xf32>
    %38 = arith.divf %36, %37 : vector<8x128xf32>
    %cst_24 = arith.constant 4.000000e+00 : f32
    %39 = vector.broadcast %cst_24 : f32 to vector<8x128xf32>
    %40 = arith.mulf %38, %39 : vector<8x128xf32>
    %cst_25 = arith.constant -2.000000e+00 : f32
    %41 = vector.broadcast %cst_25 : f32 to vector<8x128xf32>
    %42 = arith.addf %40, %41 : vector<8x128xf32>
    %c0_26 = arith.constant 0 : index
    %c0_27 = arith.constant 0 : index
    %43 = vector.load %arg10[%c0_26, %c0_27] : memref<8x128xf32, #tpu.memory_space<vmem>>, vector<8x128xf32>
    tpu.vector_store %arg10[%c0_26, %c0_27], %42 {strides = array<i32>} : memref<8x128xf32, #tpu.memory_space<vmem>>, vector<8x128xf32>,
    return
  }
  func.func @transform_0(%arg0: i32) -> (i32, i32) {
    %c0_i32 = arith.constant 0 : i32
    %c0_i32_0 = arith.constant 0 : i32
    return %arg0, %c0_i32 : i32, i32
  }
  func.func @transform_1(%arg0: i32) -> (i32, i32) {
    %c0_i32 = arith.constant 0 : i32
    %c0_i32_0 = arith.constant 0 : i32
    %c0_i32_1 = arith.constant 0 : i32
    return %c0_i32, %c0_i32_0 : i32, i32
  }
  func.func @transform_2(%arg0: i32) -> (i32, i32) {
    %c0_i32 = arith.constant 0 : i32
    %c0_i32_0 = arith.constant 0 : i32
    %c0_i32_1 = arith.constant 0 : i32
    return %c0_i32, %c0_i32_0 : i32, i32
  }
  func.func @transform_3(%arg0: i32) -> (i32, i32) {
    %c0_i32 = arith.constant 0 : i32
    %c0_i32_0 = arith.constant 0 : i32
    %c0_i32_1 = arith.constant 0 : i32
    return %c0_i32, %c0_i32_0 : i32, i32
  }
  func.func @transform_4(%arg0: i32) -> (i32, i32) {
    %c0_i32 = arith.constant 0 : i32
    %c0_i32_0 = arith.constant 0 : i32
    %c0_i32_1 = arith.constant 0 : i32
    return %c0_i32, %c0_i32_0 : i32, i32
  }
  func.func @transform_5(%arg0: i32) -> (i32, i32) {
    %c0_i32 = arith.constant 0 : i32
    %c0_i32_0 = arith.constant 0 : i32
    %c0_i32_1 = arith.constant 0 : i32
    return %c0_i32, %c0_i32_0 : i32, i32
  }
  func.func @transform_6(%arg0: i32) -> (i32, i32) {
    %c0_i32 = arith.constant 0 : i32
    %c0_i32_0 = arith.constant 0 : i32
    %c0_i32_1 = arith.constant 0 : i32
    return %c0_i32, %c0_i32_0 : i32, i32
  }
  func.func @transform_7(%arg0: i32) -> (i32, i32) {
    %c0_i32 = arith.constant 0 : i32
    %c0_i32_0 = arith.constant 0 : i32
    %c0_i32_1 = arith.constant 0 : i32
    return %c0_i32, %c0_i32_0 : i32, i32
  }
  func.func @transform_8(%arg0: i32) -> (i32, i32) {
    %c0_i32 = arith.constant 0 : i32
    %c0_i32_0 = arith.constant 0 : i32
    %c0_i32_1 = arith.constant 0 : i32
    return %c0_i32, %c0_i32_0 : i32, i32
  }
  func.func @transform_9(%arg0: i32) -> (i32, i32) {
    %c0_i32 = arith.constant 0 : i32
    %c0_i32_0 = arith.constant 0 : i32
    return %arg0, %c0_i32 : i32, i32
  }
}

module attributes {stable_mosaic.version = 11 : i64} {
  func.func @_actor_std_kernel(%arg0: i32, %arg1: memref<8x8xf32, #tpu.memory_space<vmem>>, %arg2: memref<8x512xbf16, #tpu.memory_space<vmem>>, %arg3: memref<1x512xf32, #tpu.memory_space<vmem>>, %arg4: memref<512x384xbf16, #tpu.memory_space<vmem>>, %arg5: memref<1x384xf32, #tpu.memory_space<vmem>>, %arg6: memref<384x128xbf16, #tpu.memory_space<vmem>>, %arg7: memref<1x128xf32, #tpu.memory_space<vmem>>, %arg8: memref<128x128xbf16, #tpu.memory_space<vmem>>, %arg9: memref<1x128xf32, #tpu.memory_space<vmem>>, %arg10: memref<8x128xf32, #tpu.memory_space<vmem>>) attributes {dimension_semantics = [#tpu.dimension_semantics<parallel>], iteration_bounds = array<i64: 1>, scalar_prefetch = 0 : i64, scratch_operands = 0 : i64, tpu.core_type = #tpu.core_type<tc>, window_params = [{transform_indices = @transform_0, window_bounds = array<i64: 8, 8>}, {pipeline_mode = #tpu.pipeline_mode<synchronous>, transform_indices = @transform_1, window_bounds = array<i64: 8, 512>}, {pipeline_mode = #tpu.pipeline_mode<synchronous>, transform_indices = @transform_2, window_bounds = array<i64: 1, 512>}, {pipeline_mode = #tpu.pipeline_mode<synchronous>, transform_indices = @transform_3, window_bounds = array<i64: 512, 384>}, {pipeline_mode = #tpu.pipeline_mode<synchronous>, transform_indices = @transform_4, window_bounds = array<i64: 1, 384>}, {pipeline_mode = #tpu.pipeline_mode<synchronous>, transform_indices = @transform_5, window_bounds = array<i64: 384, 128>}, {pipeline_mode = #tpu.pipeline_mode<synchronous>, transform_indices = @transform_6, window_bounds = array<i64: 1, 128>}, {pipeline_mode = #tpu.pipeline_mode<synchronous>, transform_indices = @transform_7, window_bounds = array<i64: 128, 128>}, {pipeline_mode = #tpu.pipeline_mode<synchronous>, transform_indices = @transform_8, window_bounds = array<i64: 1, 128>}, {transform_indices = @transform_9, window_bounds = array<i64: 8, 128>}]} {
    %c0 = arith.constant 0 : index
    %c0_0 = arith.constant 0 : index
    %0 = vector.load %arg1[%c0, %c0_0] : memref<8x8xf32, #tpu.memory_space<vmem>>, vector<8x8xf32>
    %1 = arith.truncf %0 : vector<8x8xf32> to vector<8x8xbf16>
    %c0_1 = arith.constant 0 : index
    %c0_2 = arith.constant 0 : index
    %2 = vector.load %arg2[%c0_1, %c0_2] : memref<8x512xbf16, #tpu.memory_space<vmem>>, vector<8x512xbf16>
    %cst = arith.constant dense<0.000000e+00> : vector<8x512xf32>
    %3 = tpu.matmul %1, %2, %cst {dimension_numbers = #tpu.dot_dimension_numbers<[1], [0], [0], [1], [0, 0, 1, 1], [], []>} : vector<8x8xbf16>, vector<8x512xbf16>, vector<8x512xf32> -> vector<8x512xf32>
    %c0_3 = arith.constant 0 : index
    %c0_4 = arith.constant 0 : index
    %4 = vector.load %arg3[%c0_3, %c0_4] : memref<1x512xf32, #tpu.memory_space<vmem>>, vector<1x512xf32>
    %5 = vector.broadcast %4 : vector<1x512xf32> to vector<8x512xf32>
    %6 = arith.addf %3, %5 : vector<8x512xf32>
    %cst_5 = arith.constant 0.000000e+00 : f32
    %7 = vector.broadcast %cst_5 : f32 to vector<8x512xf32>
    %8 = arith.maximumf %6, %7 : vector<8x512xf32>
    %9 = arith.truncf %8 : vector<8x512xf32> to vector<8x512xbf16>
    %c0_6 = arith.constant 0 : index
    %c0_7 = arith.constant 0 : index
    %10 = vector.load %arg4[%c0_6, %c0_7] : memref<512x384xbf16, #tpu.memory_space<vmem>>, vector<512x384xbf16>
    %cst_8 = arith.constant dense<0.000000e+00> : vector<8x384xf32>
    %11 = tpu.matmul %9, %10, %cst_8 {dimension_numbers = #tpu.dot_dimension_numbers<[1], [0], [0], [1], [0, 0, 1, 1], [], []>} : vector<8x512xbf16>, vector<512x384xbf16>, vector<8x384xf32> -> vector<8x384xf32>
    %c0_9 = arith.constant 0 : index
    %c0_10 = arith.constant 0 : index
    %12 = vector.load %arg5[%c0_9, %c0_10] : memref<1x384xf32, #tpu.memory_space<vmem>>, vector<1x384xf32>
    %13 = vector.broadcast %12 : vector<1x384xf32> to vector<8x384xf32>
    %14 = arith.addf %11, %13 : vector<8x384xf32>
    %cst_11 = arith.constant 0.000000e+00 : f32
    %15 = vector.broadcast %cst_11 : f32 to vector<8x384xf32>
    %16 = arith.maximumf %14, %15 : vector<8x384xf32>
    %17 = arith.truncf %16 : vector<8x384xf32> to vector<8x384xbf16>
    %c0_12 = arith.constant 0 : index
    %c0_13 = arith.constant 0 : index
    %18 = vector.load %arg6[%c0_12, %c0_13] : memref<384x128xbf16, #tpu.memory_space<vmem>>, vector<384x128xbf16>
    %cst_14 = arith.constant dense<0.000000e+00> : vector<8x128xf32>
    %19 = tpu.matmul %17, %18, %cst_14 {dimension_numbers = #tpu.dot_dimension_numbers<[1], [0], [0], [1], [0, 0, 1, 1], [], []>} : vector<8x384xbf16>, vector<384x128xbf16>, vector<8x128xf32> -> vector<8x128xf32>
    %c0_15 = arith.constant 0 : index
    %c0_16 = arith.constant 0 : index
    %20 = vector.load %arg7[%c0_15, %c0_16] : memref<1x128xf32, #tpu.memory_space<vmem>>, vector<1x128xf32>
    %21 = vector.broadcast %20 : vector<1x128xf32> to vector<8x128xf32>
    %22 = arith.addf %19, %21 : vector<8x128xf32>
    %23 = arith.negf %22 : vector<8x128xf32>
    %24 = math.exp %23 : vector<8x128xf32>
    %cst_17 = arith.constant 1.000000e+00 : f32
    %25 = vector.broadcast %cst_17 : f32 to vector<8x128xf32>
    %26 = arith.addf %25, %24 : vector<8x128xf32>
    %27 = arith.divf %25, %26 : vector<8x128xf32>
    %28 = arith.truncf %27 : vector<8x128xf32> to vector<8x128xbf16>
    %c0_18 = arith.constant 0 : index
    %c0_19 = arith.constant 0 : index
    %29 = vector.load %arg8[%c0_18, %c0_19] : memref<128x128xbf16, #tpu.memory_space<vmem>>, vector<128x128xbf16>
    %cst_20 = arith.constant dense<0.000000e+00> : vector<8x128xf32>
    %30 = tpu.matmul %28, %29, %cst_20 {dimension_numbers = #tpu.dot_dimension_numbers<[1], [0], [0], [1], [0, 0, 1, 1], [], []>} : vector<8x128xbf16>, vector<128x128xbf16>, vector<8x128xf32> -> vector<8x128xf32>
    %c0_21 = arith.constant 0 : index
    %c0_22 = arith.constant 0 : index
    %31 = vector.load %arg9[%c0_21, %c0_22] : memref<1x128xf32, #tpu.memory_space<vmem>>, vector<1x128xf32>
    %32 = vector.broadcast %31 : vector<1x128xf32> to vector<8x128xf32>
    %33 = arith.addf %30, %32 : vector<8x128xf32>
    %34 = arith.negf %33 : vector<8x128xf32>
    %35 = math.exp %34 : vector<8x128xf32>
    %cst_23 = arith.constant 1.000000e+00 : f32
    %36 = vector.broadcast %cst_23 : f32 to vector<8x128xf32>
    %37 = arith.addf %36, %35 : vector<8x128xf32>
    %38 = arith.divf %36, %37 : vector<8x128xf32>
    %cst_24 = arith.constant 4.000000e+00 : f32
    %39 = vector.broadcast %cst_24 : f32 to vector<8x128xf32>
    %40 = arith.mulf %38, %39 : vector<8x128xf32>
    %cst_25 = arith.constant -2.000000e+00 : f32
    %41 = vector.broadcast %cst_25 : f32 to vector<8x128xf32>
    %42 = arith.addf %40, %41 : vector<8x128xf32>
    %c0_26 = arith.constant 0 : index
    %c0_27 = arith.constant 0 : index
    %43 = vector.load %arg10[%c0_26, %c0_27] : memref<8x128xf32, #tpu.memory_space<vmem>>, vector<8x128xf32>
    tpu.vector_store %arg10[%c0_26, %c0_27], %42 {strides = array<i32>} : memref<8x128xf32, #tpu.memory_space<vmem>>, vector<8x128xf32>,
    return
  }
  func.func @transform_0(%arg0: i32) -> (i32, i32) {
    %c0_i32 = arith.constant 0 : i32
    %c0_i32_0 = arith.constant 0 : i32
    return %arg0, %c0_i32 : i32, i32
  }
  func.func @transform_1(%arg0: i32) -> (i32, i32) {
    %c0_i32 = arith.constant 0 : i32
    %c0_i32_0 = arith.constant 0 : i32
    %c0_i32_1 = arith.constant 0 : i32
    return %c0_i32, %c0_i32_0 : i32, i32
  }
  func.func @transform_2(%arg0: i32) -> (i32, i32) {
    %c0_i32 = arith.constant 0 : i32
    %c0_i32_0 = arith.constant 0 : i32
    %c0_i32_1 = arith.constant 0 : i32
    return %c0_i32, %c0_i32_0 : i32, i32
  }
  func.func @transform_3(%arg0: i32) -> (i32, i32) {
    %c0_i32 = arith.constant 0 : i32
    %c0_i32_0 = arith.constant 0 : i32
    %c0_i32_1 = arith.constant 0 : i32
    return %c0_i32, %c0_i32_0 : i32, i32
  }
  func.func @transform_4(%arg0: i32) -> (i32, i32) {
    %c0_i32 = arith.constant 0 : i32
    %c0_i32_0 = arith.constant 0 : i32
    %c0_i32_1 = arith.constant 0 : i32
    return %c0_i32, %c0_i32_0 : i32, i32
  }
  func.func @transform_5(%arg0: i32) -> (i32, i32) {
    %c0_i32 = arith.constant 0 : i32
    %c0_i32_0 = arith.constant 0 : i32
    %c0_i32_1 = arith.constant 0 : i32
    return %c0_i32, %c0_i32_0 : i32, i32
  }
  func.func @transform_6(%arg0: i32) -> (i32, i32) {
    %c0_i32 = arith.constant 0 : i32
    %c0_i32_0 = arith.constant 0 : i32
    %c0_i32_1 = arith.constant 0 : i32
    return %c0_i32, %c0_i32_0 : i32, i32
  }
  func.func @transform_7(%arg0: i32) -> (i32, i32) {
    %c0_i32 = arith.constant 0 : i32
    %c0_i32_0 = arith.constant 0 : i32
    %c0_i32_1 = arith.constant 0 : i32
    return %c0_i32, %c0_i32_0 : i32, i32
  }
  func.func @transform_8(%arg0: i32) -> (i32, i32) {
    %c0_i32 = arith.constant 0 : i32
    %c0_i32_0 = arith.constant 0 : i32
    %c0_i32_1 = arith.constant 0 : i32
    return %c0_i32, %c0_i32_0 : i32, i32
  }
  func.func @transform_9(%arg0: i32) -> (i32, i32) {
    %c0_i32 = arith.constant 0 : i32
    %c0_i32_0 = arith.constant 0 : i32
    return %arg0, %c0_i32 : i32, i32
  }
}

</mosaic_0001>

<llo_original>
// kernel: tpu_custom_call.1
$region0: #{tpu_custom_call.1}
  #allocation0 [shape = 'u32[]', space=smem, size = 0x4, offset = 0x4, fixed_abs, tag = 'smem constant byte address 0x4 - core index']
  #allocation1 [shape = 'u32[144,128]{1,0:T(1,128)}', space=vmem, size = 0x12000, scoped, tag = 'internal scratch']
  %s0 = inlined_call_operand.hbm [shape: f32[8,8], index: 0, kind: input, shape index: {}]
  %s1 = inlined_call_operand.hbm [shape: bf16[8,512], index: 1, kind: input, shape index: {}]
  %s2 = inlined_call_operand.vmem [shape: f32[1,512], index: 2, kind: input, shape index: {}]
  %s3 = inlined_call_operand.hbm [shape: bf16[512,384], index: 3, kind: input, shape index: {}]
  %s4 = inlined_call_operand.vmem [shape: f32[1,384], index: 4, kind: input, shape index: {}]
  %s5 = inlined_call_operand.hbm [shape: bf16[384,128], index: 5, kind: input, shape index: {}]
  %s6 = inlined_call_operand.vmem [shape: f32[1,128], index: 6, kind: input, shape index: {}]
  %s7 = inlined_call_operand.hbm [shape: bf16[128,128], index: 7, kind: input, shape index: {}]
  %s8 = inlined_call_operand.vmem [shape: f32[1,128], index: 8, kind: input, shape index: {}]
  %s9 = inlined_call_operand.hbm [shape: f32[8,128], index: 9, kind: output, shape index: {}]
  %s10 = sld [smem:[#allocation0]]
  $region66: #{tpu_custom_call.1} parent=0
    _
  %s12 = ssub.s32 1, %s10
  %s13 = scalar_select 0, %s12, %s10
  $region1: #{tpu_custom_call.1} parent=0
    #allocation2 [shape = 'u8[4096]{0}', space=vmem, size = 0x1000, scoped, tag = 'input window, operand 0, single buffered']
    #allocation3 [shape = 's32[1]{0}', space=sflag, size = 0x4, scoped, tag = 'scoped memory for tpu_custom_call.1']
    #allocation4 [shape = 's32[1]{0}', space=sflag, size = 0x4, scoped, tag = 'scoped memory for tpu_custom_call.1']
    #allocation5 [shape = 'u8[8192]{0}', space=vmem, size = 0x2000, scoped, tag = 'input window, operand 1, single buffered']
    #allocation6 [shape = 's32[1]{0}', space=sflag, size = 0x4, scoped, tag = 'scoped memory for tpu_custom_call.1']
    #allocation7 [shape = 'u8[393216]{0}', space=vmem, size = 0x60000, scoped, tag = 'input window, operand 3, single buffered']
    #allocation8 [shape = 'u8[98304]{0}', space=vmem, size = 0x18000, scoped, tag = 'input window, operand 5, single buffered']
    #allocation9 [shape = 's32[1]{0}', space=sflag, size = 0x4, scoped, tag = 'scoped memory for tpu_custom_call.1']
    #allocation10 [shape = 'u8[32768]{0}', space=vmem, size = 0x8000, scoped, tag = 'input window, operand 7, single buffered']
    #allocation11 [shape = 'u8[4096]{0}', space=vmem, size = 0x1000, scoped, tag = 'output window, operand 0, single buffered']
    %14 = vsyncpa [#allocation3], 0
    %15 = vsyncpa [#allocation6], 0
    %16 = vsyncpa [#allocation9], 0
    %17 = vsyncpa [#allocation4], 0
    // Predicated region
    $region2: #{tpu_custom_call.1} parent=1 // pred_check
      _
    $region3: #{tpu_custom_call.1} parent=1 // pred_check_branch
      %19 = sbr.rel (0) target = $region5
    $region4: #{tpu_custom_call.1} parent=1 // pred_region
      %s21 = ssub.s32 128, 128
      %22 = vsyncadd [#allocation3], %s21
      %s24 = sshll.u32 [#allocation2], 4
      %s25 = int_to_ptr.vmem [resolvable:$true] %s24
      %27 = dma.hbm_to_vmem [thread:$0]  %s0, 128, %s25, [#allocation3]
    $region5: #{tpu_custom_call.1} parent=1 // pred_fallthru
      _
    // Predicated region
    $region6: #{tpu_custom_call.1} parent=1 // pred_check
      _
    $region7: #{tpu_custom_call.1} parent=1 // pred_check_branch
      %29 = sbr.rel (0) target = $region9
    $region8: #{tpu_custom_call.1} parent=1 // pred_region
      %s31 = ssub.s32 256, 256
      %32 = vsyncadd [#allocation6], %s31
      %s34 = sshll.u32 [#allocation5], 4
      %s35 = int_to_ptr.vmem [resolvable:$true] %s34
      %37 = dma.hbm_to_vmem [thread:$0]  %s1, 256, %s35, [#allocation6]
    $region9: #{tpu_custom_call.1} parent=1 // pred_fallthru
      _
    // Predicated region
    $region10: #{tpu_custom_call.1} parent=1 // pred_check
      _
    $region11: #{tpu_custom_call.1} parent=1 // pred_check_branch
      %39 = sbr.rel (0) target = $region13
    $region12: #{tpu_custom_call.1} parent=1 // pred_region
      _
    $region13: #{tpu_custom_call.1} parent=1 // pred_fallthru
      _
    // Predicated region
    $region14: #{tpu_custom_call.1} parent=1 // pred_check
      _
    $region15: #{tpu_custom_call.1} parent=1 // pred_check_branch
      %41 = sbr.rel (0) target = $region17
    $region16: #{tpu_custom_call.1} parent=1 // pred_region
      %s43 = ssub.s32 12288, 12288
      %44 = vsyncadd [#allocation6], %s43
      %s45 = sshll.u32 [#allocation7], 4
      %s46 = int_to_ptr.vmem [resolvable:$true] %s45
      %51 = dma.hbm_to_vmem [thread:$0]  %s3, 12288, %s46, [#allocation6], 192, 192, 12
    $region17: #{tpu_custom_call.1} parent=1 // pred_fallthru
      _
    // Predicated region
    $region18: #{tpu_custom_call.1} parent=1 // pred_check
      _
    $region19: #{tpu_custom_call.1} parent=1 // pred_check_branch
      %53 = sbr.rel (0) target = $region21
    $region20: #{tpu_custom_call.1} parent=1 // pred_region
      _
    $region21: #{tpu_custom_call.1} parent=1 // pred_fallthru
      _
    // Predicated region
    $region22: #{tpu_custom_call.1} parent=1 // pred_check
      _
    $region23: #{tpu_custom_call.1} parent=1 // pred_check_branch
      %55 = sbr.rel (0) target = $region25
    $region24: #{tpu_custom_call.1} parent=1 // pred_region
      %s57 = ssub.s32 3072, 3072
      %58 = vsyncadd [#allocation9], %s57
      %s59 = sshll.u32 [#allocation8], 4
      %s60 = int_to_ptr.vmem [resolvable:$true] %s59
      %65 = dma.hbm_to_vmem [thread:$0]  %s5, 3072, %s60, [#allocation9], 64, 64, 4
    $region25: #{tpu_custom_call.1} parent=1 // pred_fallthru
      _
    // Predicated region
    $region26: #{tpu_custom_call.1} parent=1 // pred_check
      _
    $region27: #{tpu_custom_call.1} parent=1 // pred_check_branch
      %67 = sbr.rel (0) target = $region29
    $region28: #{tpu_custom_call.1} parent=1 // pred_region
      _
    $region29: #{tpu_custom_call.1} parent=1 // pred_fallthru
      _
    // Predicated region
    $region30: #{tpu_custom_call.1} parent=1 // pred_check
      _
    $region31: #{tpu_custom_call.1} parent=1 // pred_check_branch
      %69 = sbr.rel (0) target = $region33
    $region32: #{tpu_custom_call.1} parent=1 // pred_region
      %s71 = ssub.s32 1024, 1024
      %72 = vsyncadd [#allocation9], %s71
      %s73 = sshll.u32 [#allocation10], 4
      %s74 = int_to_ptr.vmem [resolvable:$true] %s73
      %79 = dma.hbm_to_vmem [thread:$0]  %s7, 1024, %s74, [#allocation9], 64, 64, 4
    $region33: #{tpu_custom_call.1} parent=1 // pred_fallthru
      _
    // Predicated region
    $region34: #{tpu_custom_call.1} parent=1 // pred_check
      _
    $region35: #{tpu_custom_call.1} parent=1 // pred_check_branch
      %81 = sbr.rel (0) target = $region37
    $region36: #{tpu_custom_call.1} parent=1 // pred_region
      _
    $region37: #{tpu_custom_call.1} parent=1 // pred_fallthru
      _
    // Predicated region
    $region38: #{tpu_custom_call.1} parent=1 // pred_check
      _
    $region39: #{tpu_custom_call.1} parent=1 // pred_check_branch
      %83 = sbr.rel (0) target = $region41
    $region40: #{tpu_custom_call.1} parent=1 // pred_region
      %84 = dma.done [#allocation3], 128
    $region41: #{tpu_custom_call.1} parent=1 // pred_fallthru
      _
    // Predicated region
    $region42: #{tpu_custom_call.1} parent=1 // pred_check
      _
    $region43: #{tpu_custom_call.1} parent=1 // pred_check_branch
      %86 = sbr.rel (0) target = $region45
    $region44: #{tpu_custom_call.1} parent=1 // pred_region
      %87 = dma.done [#allocation6], 256
    $region45: #{tpu_custom_call.1} parent=1 // pred_fallthru
      _
    // Predicated region
    $region46: #{tpu_custom_call.1} parent=1 // pred_check
      _
    $region47: #{tpu_custom_call.1} parent=1 // pred_check_branch
      %89 = sbr.rel (0) target = $region49
    $region48: #{tpu_custom_call.1} parent=1 // pred_region
      %90 = dma.done [#allocation6], 12288
    $region49: #{tpu_custom_call.1} parent=1 // pred_fallthru
      _
    // Predicated region
    $region50: #{tpu_custom_call.1} parent=1 // pred_check
      _
    $region51: #{tpu_custom_call.1} parent=1 // pred_check_branch
      %92 = sbr.rel (0) target = $region53
    $region52: #{tpu_custom_call.1} parent=1 // pred_region
      %93 = dma.done [#allocation9], 3072
    $region53: #{tpu_custom_call.1} parent=1 // pred_fallthru
      _
    // Predicated region
    $region54: #{tpu_custom_call.1} parent=1 // pred_check
      _
    $region55: #{tpu_custom_call.1} parent=1 // pred_check_branch
      %95 = sbr.rel (0) target = $region57
    $region56: #{tpu_custom_call.1} parent=1 // pred_region
      %96 = dma.done [#allocation9], 1024
    $region57: #{tpu_custom_call.1} parent=1 // pred_fallthru
      _
    %v98 = vld [vmem:[#allocation2] sm:$0xff]
    %v99 = vpack.c.bf16 %v98, %v98
    %v100 = vld [vmem:[#allocation5] sm:$0xff]
    %v101 = vld [vmem:[#allocation5 + $0x8] sm:$0xff]
    %v102 = vld [vmem:[%s2] sm:$0xf]
    %v104 = vlaneseq
    %v105 = vshrl.u32 %v104, 7
    %v106 = vsub.s32 0, %v105
    %v107 = vrot.slane %v102, %v106
    %v108 = vlaneseq
    %v109 = vshrl.u32 %v108, 7
    %v110 = vsub.s32 1, %v109
    %v111 = vrot.slane %v102, %v110
    %v112 = vlaneseq
    %v113 = vshrl.u32 %v112, 7
    %v114 = vsub.s32 2, %v113
    %v115 = vrot.slane %v102, %v114
    %v116 = vlaneseq
    %v117 = vshrl.u32 %v116, 7
    %v118 = vsub.s32 3, %v117
    %v119 = vrot.slane %v102, %v118
    %v126 = vunpack.c.l.b16 %v100
    %v127 = vunpack.c.h.b16 %v100
    %v128 = vunpack.c.l.b16 %v101
    %v129 = vunpack.c.h.b16 %v101
    %v130 = vpack.c.b16 %v126, %v126
    %v131 = vpack.c.b16 %v127, %v127
    %v132 = vpack.c.b16 %v128, %v128
    %v133 = vpack.c.b16 %v129, %v129
    %vm134 = vcmask 64512
    %v136 = vsel %vm134, %v99, 0
    %vm138 = vcmask 1043456
    %v140 = vsel %vm138, %v130, 0
    %v143 = vsel %vm138, %v131, 0
    %v146 = vsel %vm138, %v132, 0
    %v149 = vsel %vm138, %v133, 0
    %151 = vmatprep.subr.bf16.mxu0 %v143
    %152 = vmatpush1.bf16.msra.mxu0 %v140
    %153 = vmatprep.subr.bf16.mxu0 0
    %154 = vmatpush1.bf16.msra.mxu0 0
    %155 = vmatprep.subr.bf16.mxu0 0
    %156 = vmatpush1.bf16.msra.mxu0 0
    %157 = vmatprep.subr.bf16.mxu0 0
    %158 = vmatpush1.bf16.msra.mxu0 0
    %159 = vmatprep.subr.bf16.mxu0 0
    %160 = vmatpush1.bf16.msra.mxu0 0
    %161 = vmatprep.subr.bf16.mxu0 0
    %162 = vmatpush1.bf16.msra.mxu0 0
    %163 = vmatprep.subr.bf16.mxu0 0
    %164 = vmatpush1.bf16.msra.mxu0 0
    %165 = vmatprep.subr.bf16.mxu0 0
    %166 = vmatpush1.bf16.msra.mxu0 0
    %167 = vmatprep.subr.bf16.mxu0 0
    %168 = vmatpush1.bf16.msra.mxu0 0
    %169 = vmatprep.subr.bf16.mxu0 0
    %170 = vmatpush1.bf16.msra.mxu0 0
    %171 = vmatprep.subr.bf16.mxu0 0
    %172 = vmatpush1.bf16.msra.mxu0 0
    %173 = vmatprep.subr.bf16.mxu0 0
    %174 = vmatpush1.bf16.msra.mxu0 0
    %175 = vmatprep.subr.bf16.mxu0 0
    %176 = vmatpush1.bf16.msra.mxu0 0
    %177 = vmatprep.subr.bf16.mxu0 0
    %178 = vmatpush1.bf16.msra.mxu0 0
    %179 = vmatprep.subr.bf16.mxu0 0
    %180 = vmatpush1.bf16.msra.mxu0 0
    %181 = vmatprep.subr.bf16.mxu0 0
    %182 = vmatpush1.bf16.msra.mxu0 0
    %183 = vmatprep.mubr.bf16.mxu0 0
    %184 = vmatmul.mubr.bf16.gmra.mrb[0].mxu0 %v136
    %v185 = vpop.f32.mrb[0].mxu0
    %v186 = vadd.f32 %v107, %v185
    %v187 = vpop.f32.mrb[0].mxu0
    %v188 = vadd.f32 %v111, %v187
    %v189 = vpop.f32.mrb[0].mxu0
    %v190 = vpop.f32.mrb[0].mxu0
    %191 = vdwg.mxu0
    %192 = vmatprep.subr.bf16.mxu0 %v149
    %193 = vmatpush1.bf16.msra.mxu0 %v146
    %194 = vmatprep.subr.bf16.mxu0 0
    %195 = vmatpush1.bf16.msra.mxu0 0
    %196 = vmatprep.subr.bf16.mxu0 0
    %197 = vmatpush1.bf16.msra.mxu0 0
    %198 = vmatprep.subr.bf16.mxu0 0
    %199 = vmatpush1.bf16.msra.mxu0 0
    %200 = vmatprep.subr.bf16.mxu0 0
    %201 = vmatpush1.bf16.msra.mxu0 0
    %202 = vmatprep.subr.bf16.mxu0 0
    %203 = vmatpush1.bf16.msra.mxu0 0
    %204 = vmatprep.subr.bf16.mxu0 0
    %205 = vmatpush1.bf16.msra.mxu0 0
    %206 = vmatprep.subr.bf16.mxu0 0
    %207 = vmatpush1.bf16.msra.mxu0 0
    %208 = vmatprep.subr.bf16.mxu0 0
    %209 = vmatpush1.bf16.msra.mxu0 0
    %210 = vmatprep.subr.bf16.mxu0 0
    %211 = vmatpush1.bf16.msra.mxu0 0
    %212 = vmatprep.subr.bf16.mxu0 0
    %213 = vmatpush1.bf16.msra.mxu0 0
    %214 = vmatprep.subr.bf16.mxu0 0
    %215 = vmatpush1.bf16.msra.mxu0 0
    %216 = vmatprep.subr.bf16.mxu0 0
    %217 = vmatpush1.bf16.msra.mxu0 0
    %218 = vmatprep.subr.bf16.mxu0 0
    %219 = vmatpush1.bf16.msra.mxu0 0
    %220 = vmatprep.subr.bf16.mxu0 0
    %221 = vmatpush1.bf16.msra.mxu0 0
    %222 = vmatprep.subr.bf16.mxu0 0
    %223 = vmatpush1.bf16.msra.mxu0 0
    %224 = vmatprep.mubr.bf16.mxu0 0
    %225 = vmatmul.mubr.bf16.gmra.mrb[0].mxu0 %v136
    %v226 = vpop.f32.mrb[0].mxu0
    %v227 = vadd.f32 %v115, %v226
    %v228 = vpop.f32.mrb[0].mxu0
    %v229 = vadd.f32 %v119, %v228
    %v230 = vpop.f32.mrb[0].mxu0
    %v231 = vpop.f32.mrb[0].mxu0
    %232 = vdwg.mxu0
    %v233 = vmax.f32 %v186, 0.0
    %v234 = vmax.f32 %v188, 0.0
    %v235 = vmax.f32 %v227, 0.0
    %v236 = vmax.f32 %v229, 0.0
    %v237 = vpack.c.bf16 %v233, %v233
    %v238 = vpack.c.bf16 %v234, %v234
    %v239 = vpack.c.bf16 %v235, %v235
    %v240 = vpack.c.bf16 %v236, %v236
    %v241 = vld [vmem:[#allocation7] sm:$0xff]
    %v242 = vld [vmem:[#allocation7 + $0x8] sm:$0xf]
    %v243 = vld [vmem:[#allocation7 + $0xc] sm:$0xff]
    %v244 = vld [vmem:[#allocation7 + $0x14] sm:$0xf]
    %v245 = vld [vmem:[#allocation7 + $0x18] sm:$0xff]
    %v246 = vld [vmem:[#allocation7 + $0x20] sm:$0xf]
    %v247 = vld [vmem:[#allocation7 + $0x24] sm:$0xff]
    %v248 = vld [vmem:[#allocation7 + $0x2c] sm:$0xf]
    %v249 = vld [vmem:[#allocation7 + $0x30] sm:$0xff]
    %v250 = vld [vmem:[#allocation7 + $0x38] sm:$0xf]
    %v251 = vld [vmem:[#allocation7 + $0x3c] sm:$0xff]
    %v252 = vld [vmem:[#allocation7 + $0x44] sm:$0xf]
    %v253 = vld [vmem:[#allocation7 + $0x48] sm:$0xff]
    %v254 = vld [vmem:[#allocation7 + $0x50] sm:$0xf]
    %v255 = vld [vmem:[#allocation7 + $0x54] sm:$0xff]
    %v256 = vld [vmem:[#allocation7 + $0x5c] sm:$0xf]
    %v257 = vld [vmem:[#allocation7 + $0x60] sm:$0xff]
    %v258 = vld [vmem:[#allocation7 + $0x68] sm:$0xf]
    %v259 = vld [vmem:[#allocation7 + $0x6c] sm:$0xff]
    %v260 = vld [vmem:[#allocation7 + $0x74] sm:$0xf]
    %v261 = vld [vmem:[#allocation7 + $0x78] sm:$0xff]
    %v262 = vld [vmem:[#allocation7 + $0x80] sm:$0xf]
    %v263 = vld [vmem:[#allocation7 + $0x84] sm:$0xff]
    %v264 = vld [vmem:[#allocation7 + $0x8c] sm:$0xf]
    %v265 = vld [vmem:[#allocation7 + $0x90] sm:$0xff]
    %v266 = vld [vmem:[#allocation7 + $0x98] sm:$0xf]
    %v267 = vld [vmem:[#allocation7 + $0x9c] sm:$0xff]
    %v268 = vld [vmem:[#allocation7 + $0xa4] sm:$0xf]
    %v269 = vld [vmem:[#allocation7 + $0xa8] sm:$0xff]
    %v270 = vld [vmem:[#allocation7 + $0xb0] sm:$0xf]
    %v271 = vld [vmem:[#allocation7 + $0xb4] sm:$0xff]
    %v272 = vld [vmem:[#allocation7 + $0xbc] sm:$0xf]
    %v273 = vld [vmem:[#allocation7 + $0xc0] sm:$0xff]
    %v274 = vld [vmem:[#allocation7 + $0xc8] sm:$0xf]
    %v275 = vld [vmem:[#allocation7 + $0xcc] sm:$0xff]
    %v276 = vld [vmem:[#allocation7 + $0xd4] sm:$0xf]
    %v277 = vld [vmem:[#allocation7 + $0xd8] sm:$0xff]
    %v278 = vld [vmem:[#allocation7 + $0xe0] sm:$0xf]
    %v279 = vld [vmem:[#allocation7 + $0xe4] sm:$0xff]
    %v280 = vld [vmem:[#allocation7 + $0xec] sm:$0xf]
    %v281 = vld [vmem:[#allocation7 + $0xf0] sm:$0xff]
    %v282 = vld [vmem:[#allocation7 + $0xf8] sm:$0xf]
    %v283 = vld [vmem:[#allocation7 + $0xfc] sm:$0xff]
    %v284 = vld [vmem:[#allocation7 + $0x104] sm:$0xf]
    %v285 = vld [vmem:[#allocation7 + $0x108] sm:$0xff]
    %v286 = vld [vmem:[#allocation7 + $0x110] sm:$0xf]
    %v287 = vld [vmem:[#allocation7 + $0x114] sm:$0xff]
    %v288 = vld [vmem:[#allocation7 + $0x11c] sm:$0xf]
    %v289 = vld [vmem:[#allocation7 + $0x120] sm:$0xff]
    %v290 = vld [vmem:[#allocation7 + $0x128] sm:$0xf]
    %v291 = vld [vmem:[#allocation7 + $0x12c] sm:$0xff]
    %v292 = vld [vmem:[#allocation7 + $0x134] sm:$0xf]
    %v293 = vld [vmem:[#allocation7 + $0x138] sm:$0xff]
    %v294 = vld [vmem:[#allocation7 + $0x140] sm:$0xf]
    %v295 = vld [vmem:[#allocation7 + $0x144] sm:$0xff]
    %v296 = vld [vmem:[#allocation7 + $0x14c] sm:$0xf]
    %v297 = vld [vmem:[#allocation7 + $0x150] sm:$0xff]
    %v298 = vld [vmem:[#allocation7 + $0x158] sm:$0xf]
    %v299 = vld [vmem:[#allocation7 + $0x15c] sm:$0xff]
    %v300 = vld [vmem:[#allocation7 + $0x164] sm:$0xf]
    %v301 = vld [vmem:[#allocation7 + $0x168] sm:$0xff]
    %v302 = vld [vmem:[#allocation7 + $0x170] sm:$0xf]
    %v303 = vld [vmem:[#allocation7 + $0x174] sm:$0xff]
    %v304 = vld [vmem:[#allocation7 + $0x17c] sm:$0xf]
    %v305 = vld [vmem:[#allocation7 + $0x180] sm:$0xff]
    %v306 = vld [vmem:[#allocation7 + $0x188] sm:$0xf]
    %v307 = vld [vmem:[#allocation7 + $0x18c] sm:$0xff]
    %v308 = vld [vmem:[#allocation7 + $0x194] sm:$0xf]
    %v309 = vld [vmem:[#allocation7 + $0x198] sm:$0xff]
    %v310 = vld [vmem:[#allocation7 + $0x1a0] sm:$0xf]
    %v311 = vld [vmem:[#allocation7 + $0x1a4] sm:$0xff]
    %v312 = vld [vmem:[#allocation7 + $0x1ac] sm:$0xf]
    %v313 = vld [vmem:[#allocation7 + $0x1b0] sm:$0xff]
    %v314 = vld [vmem:[#allocation7 + $0x1b8] sm:$0xf]
    %v315 = vld [vmem:[#allocation7 + $0x1bc] sm:$0xff]
    %v316 = vld [vmem:[#allocation7 + $0x1c4] sm:$0xf]
    %v317 = vld [vmem:[#allocation7 + $0x1c8] sm:$0xff]
    %v318 = vld [vmem:[#allocation7 + $0x1d0] sm:$0xf]
    %v319 = vld [vmem:[#allocation7 + $0x1d4] sm:$0xff]
    %v320 = vld [vmem:[#allocation7 + $0x1dc] sm:$0xf]
    %v321 = vld [vmem:[#allocation7 + $0x1e0] sm:$0xff]
    %v322 = vld [vmem:[#allocation7 + $0x1e8] sm:$0xf]
    %v323 = vld [vmem:[#allocation7 + $0x1ec] sm:$0xff]
    %v324 = vld [vmem:[#allocation7 + $0x1f4] sm:$0xf]
    %v325 = vld [vmem:[#allocation7 + $0x1f8] sm:$0xff]
    %v326 = vld [vmem:[#allocation7 + $0x200] sm:$0xf]
    %v327 = vld [vmem:[#allocation7 + $0x204] sm:$0xff]
    %v328 = vld [vmem:[#allocation7 + $0x20c] sm:$0xf]
    %v329 = vld [vmem:[#allocation7 + $0x210] sm:$0xff]
    %v330 = vld [vmem:[#allocation7 + $0x218] sm:$0xf]
    %v331 = vld [vmem:[#allocation7 + $0x21c] sm:$0xff]
    %v332 = vld [vmem:[#allocation7 + $0x224] sm:$0xf]
    %v333 = vld [vmem:[#allocation7 + $0x228] sm:$0xff]
    %v334 = vld [vmem:[#allocation7 + $0x230] sm:$0xf]
    %v335 = vld [vmem:[#allocation7 + $0x234] sm:$0xff]
    %v336 = vld [vmem:[#allocation7 + $0x23c] sm:$0xf]
    %v337 = vld [vmem:[#allocation7 + $0x240] sm:$0xff]
    %v338 = vld [vmem:[#allocation7 + $0x248] sm:$0xf]
    %v339 = vld [vmem:[#allocation7 + $0x24c] sm:$0xff]
    %v340 = vld [vmem:[#allocation7 + $0x254] sm:$0xf]
    %v341 = vld [vmem:[#allocation7 + $0x258] sm:$0xff]
    %v342 = vld [vmem:[#allocation7 + $0x260] sm:$0xf]
    %v343 = vld [vmem:[#allocation7 + $0x264] sm:$0xff]
    %v344 = vld [vmem:[#allocation7 + $0x26c] sm:$0xf]
    %v345 = vld [vmem:[#allocation7 + $0x270] sm:$0xff]
    %v346 = vld [vmem:[#allocation7 + $0x278] sm:$0xf]
    %v347 = vld [vmem:[#allocation7 + $0x27c] sm:$0xff]
    %v348 = vld [vmem:[#allocation7 + $0x284] sm:$0xf]
    %v349 = vld [vmem:[#allocation7 + $0x288] sm:$0xff]
    %v350 = vld [vmem:[#allocation7 + $0x290] sm:$0xf]
    %v351 = vld [vmem:[#allocation7 + $0x294] sm:$0xff]
    %v352 = vld [vmem:[#allocation7 + $0x29c] sm:$0xf]
    %v353 = vld [vmem:[#allocation7 + $0x2a0] sm:$0xff]
    %v354 = vld [vmem:[#allocation7 + $0x2a8] sm:$0xf]
    %v355 = vld [vmem:[#allocation7 + $0x2ac] sm:$0xff]
    %v356 = vld [vmem:[#allocation7 + $0x2b4] sm:$0xf]
    %v357 = vld [vmem:[#allocation7 + $0x2b8] sm:$0xff]
    %v358 = vld [vmem:[#allocation7 + $0x2c0] sm:$0xf]
    %v359 = vld [vmem:[#allocation7 + $0x2c4] sm:$0xff]
    %v360 = vld [vmem:[#allocation7 + $0x2cc] sm:$0xf]
    %v361 = vld [vmem:[#allocation7 + $0x2d0] sm:$0xff]
    %v362 = vld [vmem:[#allocation7 + $0x2d8] sm:$0xf]
    %v363 = vld [vmem:[#allocation7 + $0x2dc] sm:$0xff]
    %v364 = vld [vmem:[#allocation7 + $0x2e4] sm:$0xf]
    %v365 = vld [vmem:[#allocation7 + $0x2e8] sm:$0xff]
    %v366 = vld [vmem:[#allocation7 + $0x2f0] sm:$0xf]
    %v367 = vld [vmem:[#allocation7 + $0x2f4] sm:$0xff]
    %v368 = vld [vmem:[#allocation7 + $0x2fc] sm:$0xf]
    %v369 = vld [vmem:[%s4] sm:$0x7]
    %v371 = vlaneseq
    %v372 = vshrl.u32 %v371, 7
    %v373 = vsub.s32 0, %v372
    %v374 = vrot.slane %v369, %v373
    %v375 = vlaneseq
    %v376 = vshrl.u32 %v375, 7
    %v377 = vsub.s32 1, %v376
    %v378 = vrot.slane %v369, %v377
    %v379 = vlaneseq
    %v380 = vshrl.u32 %v379, 7
    %v381 = vsub.s32 2, %v380
    %v382 = vrot.slane %v369, %v381
    %v514 = vunpack.c.l.b16 %v241
    %v515 = vunpack.c.h.b16 %v241
    %v516 = vunpack.c.l.b16 %v242
    %v517 = vunpack.c.l.b16 %v243
    %v518 = vunpack.c.h.b16 %v243
    %v519 = vunpack.c.l.b16 %v244
    %v520 = vunpack.c.l.b16 %v245
    %v521 = vunpack.c.h.b16 %v245
    %v522 = vunpack.c.l.b16 %v246
    %v523 = vunpack.c.l.b16 %v247
    %v524 = vunpack.c.h.b16 %v247
    %v525 = vunpack.c.l.b16 %v248
    %v526 = vunpack.c.l.b16 %v249
    %v527 = vunpack.c.h.b16 %v249
    %v528 = vunpack.c.l.b16 %v250
    %v529 = vunpack.c.l.b16 %v251
    %v530 = vunpack.c.h.b16 %v251
    %v531 = vunpack.c.l.b16 %v252
    %v532 = vunpack.c.l.b16 %v253
    %v533 = vunpack.c.h.b16 %v253
    %v534 = vunpack.c.l.b16 %v254
    %v535 = vunpack.c.l.b16 %v255
    %v536 = vunpack.c.h.b16 %v255
    %v537 = vunpack.c.l.b16 %v256
    %v538 = vunpack.c.l.b16 %v257
    %v539 = vunpack.c.h.b16 %v257
    %v540 = vunpack.c.l.b16 %v258
    %v541 = vunpack.c.l.b16 %v259
    %v542 = vunpack.c.h.b16 %v259
    %v543 = vunpack.c.l.b16 %v260
    %v544 = vunpack.c.l.b16 %v261
    %v545 = vunpack.c.h.b16 %v261
    %v546 = vunpack.c.l.b16 %v262
    %v547 = vunpack.c.l.b16 %v263
    %v548 = vunpack.c.h.b16 %v263
    %v549 = vunpack.c.l.b16 %v264
    %v550 = vunpack.c.l.b16 %v265
    %v551 = vunpack.c.h.b16 %v265
    %v552 = vunpack.c.l.b16 %v266
    %v553 = vunpack.c.l.b16 %v267
    %v554 = vunpack.c.h.b16 %v267
    %v555 = vunpack.c.l.b16 %v268
    %v556 = vunpack.c.l.b16 %v269
    %v557 = vunpack.c.h.b16 %v269
    %v558 = vunpack.c.l.b16 %v270
    %v559 = vunpack.c.l.b16 %v271
    %v560 = vunpack.c.h.b16 %v271
    %v561 = vunpack.c.l.b16 %v272
    %v562 = vunpack.c.l.b16 %v273
    %v563 = vunpack.c.h.b16 %v273
    %v564 = vunpack.c.l.b16 %v274
    %v565 = vunpack.c.l.b16 %v275
    %v566 = vunpack.c.h.b16 %v275
    %v567 = vunpack.c.l.b16 %v276
    %v568 = vunpack.c.l.b16 %v277
    %v569 = vunpack.c.h.b16 %v277
    %v570 = vunpack.c.l.b16 %v278
    %v571 = vunpack.c.l.b16 %v279
    %v572 = vunpack.c.h.b16 %v279
    %v573 = vunpack.c.l.b16 %v280
    %v574 = vunpack.c.l.b16 %v281
    %v575 = vunpack.c.h.b16 %v281
    %v576 = vunpack.c.l.b16 %v282
    %v577 = vunpack.c.l.b16 %v283
    %v578 = vunpack.c.h.b16 %v283
    %v579 = vunpack.c.l.b16 %v284
    %v580 = vunpack.c.l.b16 %v285
    %v581 = vunpack.c.h.b16 %v285
    %v582 = vunpack.c.l.b16 %v286
    %v583 = vunpack.c.l.b16 %v287
    %v584 = vunpack.c.h.b16 %v287
    %v585 = vunpack.c.l.b16 %v288
    %v586 = vunpack.c.l.b16 %v289
    %v587 = vunpack.c.h.b16 %v289
    %v588 = vunpack.c.l.b16 %v290
    %v589 = vunpack.c.l.b16 %v291
    %v590 = vunpack.c.h.b16 %v291
    %v591 = vunpack.c.l.b16 %v292
    %v592 = vunpack.c.l.b16 %v293
    %v593 = vunpack.c.h.b16 %v293
    %v594 = vunpack.c.l.b16 %v294
    %v595 = vunpack.c.l.b16 %v295
    %v596 = vunpack.c.h.b16 %v295
    %v597 = vunpack.c.l.b16 %v296
    %v598 = vunpack.c.l.b16 %v297
    %v599 = vunpack.c.h.b16 %v297
    %v600 = vunpack.c.l.b16 %v298
    %v601 = vunpack.c.l.b16 %v299
    %v602 = vunpack.c.h.b16 %v299
    %v603 = vunpack.c.l.b16 %v300
    %v604 = vunpack.c.l.b16 %v301
    %v605 = vunpack.c.h.b16 %v301
    %v606 = vunpack.c.l.b16 %v302
    %v607 = vunpack.c.l.b16 %v303
    %v608 = vunpack.c.h.b16 %v303
    %v609 = vunpack.c.l.b16 %v304
    %v610 = vunpack.c.l.b16 %v305
    %v611 = vunpack.c.h.b16 %v305
    %v612 = vunpack.c.l.b16 %v306
    %v613 = vunpack.c.l.b16 %v307
    %v614 = vunpack.c.h.b16 %v307
    %v615 = vunpack.c.l.b16 %v308
    %v616 = vunpack.c.l.b16 %v309
    %v617 = vunpack.c.h.b16 %v309
    %v618 = vunpack.c.l.b16 %v310
    %v619 = vunpack.c.l.b16 %v311
    %v620 = vunpack.c.h.b16 %v311
    %v621 = vunpack.c.l.b16 %v312
    %v622 = vunpack.c.l.b16 %v313
    %v623 = vunpack.c.h.b16 %v313
    %v624 = vunpack.c.l.b16 %v314
    %v625 = vunpack.c.l.b16 %v315
    %v626 = vunpack.c.h.b16 %v315
    %v627 = vunpack.c.l.b16 %v316
    %v628 = vunpack.c.l.b16 %v317
    %v629 = vunpack.c.h.b16 %v317
    %v630 = vunpack.c.l.b16 %v318
    %v631 = vunpack.c.l.b16 %v319
    %v632 = vunpack.c.h.b16 %v319
    %v633 = vunpack.c.l.b16 %v320
    %v634 = vunpack.c.l.b16 %v321
    %v635 = vunpack.c.h.b16 %v321
    %v636 = vunpack.c.l.b16 %v322
    %v637 = vunpack.c.l.b16 %v323
    %v638 = vunpack.c.h.b16 %v323
    %v639 = vunpack.c.l.b16 %v324
    %v640 = vunpack.c.l.b16 %v325
    %v641 = vunpack.c.h.b16 %v325
    %v642 = vunpack.c.l.b16 %v326
    %v643 = vunpack.c.l.b16 %v327
    %v644 = vunpack.c.h.b16 %v327
    %v645 = vunpack.c.l.b16 %v328
    %v646 = vunpack.c.l.b16 %v329
    %v647 = vunpack.c.h.b16 %v329
    %v648 = vunpack.c.l.b16 %v330
    %v649 = vunpack.c.l.b16 %v331
    %v650 = vunpack.c.h.b16 %v331
    %v651 = vunpack.c.l.b16 %v332
    %v652 = vunpack.c.l.b16 %v333
    %v653 = vunpack.c.h.b16 %v333
    %v654 = vunpack.c.l.b16 %v334
    %v655 = vunpack.c.l.b16 %v335
    %v656 = vunpack.c.h.b16 %v335
    %v657 = vunpack.c.l.b16 %v336
    %v658 = vunpack.c.l.b16 %v337
    %v659 = vunpack.c.h.b16 %v337
    %v660 = vunpack.c.l.b16 %v338
    %v661 = vunpack.c.l.b16 %v339
    %v662 = vunpack.c.h.b16 %v339
    %v663 = vunpack.c.l.b16 %v340
    %v664 = vunpack.c.l.b16 %v341
    %v665 = vunpack.c.h.b16 %v341
    %v666 = vunpack.c.l.b16 %v342
    %v667 = vunpack.c.l.b16 %v343
    %v668 = vunpack.c.h.b16 %v343
    %v669 = vunpack.c.l.b16 %v344
    %v670 = vunpack.c.l.b16 %v345
    %v671 = vunpack.c.h.b16 %v345
    %v672 = vunpack.c.l.b16 %v346
    %v673 = vunpack.c.l.b16 %v347
    %v674 = vunpack.c.h.b16 %v347
    %v675 = vunpack.c.l.b16 %v348
    %v676 = vunpack.c.l.b16 %v349
    %v677 = vunpack.c.h.b16 %v349
    %v678 = vunpack.c.l.b16 %v350
    %v679 = vunpack.c.l.b16 %v351
    %v680 = vunpack.c.h.b16 %v351
    %v681 = vunpack.c.l.b16 %v352
    %v682 = vunpack.c.l.b16 %v353
    %v683 = vunpack.c.h.b16 %v353
    %v684 = vunpack.c.l.b16 %v354
    %v685 = vunpack.c.l.b16 %v355
    %v686 = vunpack.c.h.b16 %v355
    %v687 = vunpack.c.l.b16 %v356
    %v688 = vunpack.c.l.b16 %v357
    %v689 = vunpack.c.h.b16 %v357
    %v690 = vunpack.c.l.b16 %v358
    %v691 = vunpack.c.l.b16 %v359
    %v692 = vunpack.c.h.b16 %v359
    %v693 = vunpack.c.l.b16 %v360
    %v694 = vunpack.c.l.b16 %v361
    %v695 = vunpack.c.h.b16 %v361
    %v696 = vunpack.c.l.b16 %v362
    %v697 = vunpack.c.l.b16 %v363
    %v698 = vunpack.c.h.b16 %v363
    %v699 = vunpack.c.l.b16 %v364
    %v700 = vunpack.c.l.b16 %v365
    %v701 = vunpack.c.h.b16 %v365
    %v702 = vunpack.c.l.b16 %v366
    %v703 = vunpack.c.l.b16 %v367
    %v704 = vunpack.c.h.b16 %v367
    %v705 = vunpack.c.l.b16 %v368
    %v706 = vpack.c.b16 %v517, %v514
    %v707 = vpack.c.b16 %v518, %v515
    %v708 = vpack.c.b16 %v519, %v516
    %v709 = vpack.c.b16 %v523, %v520
    %v710 = vpack.c.b16 %v524, %v521
    %v711 = vpack.c.b16 %v525, %v522
    %v712 = vpack.c.b16 %v529, %v526
    %v713 = vpack.c.b16 %v530, %v527
    %v714 = vpack.c.b16 %v531, %v528
    %v715 = vpack.c.b16 %v535, %v532
    %v716 = vpack.c.b16 %v536, %v533
    %v717 = vpack.c.b16 %v537, %v534
    %v718 = vpack.c.b16 %v541, %v538
    %v719 = vpack.c.b16 %v542, %v539
    %v720 = vpack.c.b16 %v543, %v540
    %v721 = vpack.c.b16 %v547, %v544
    %v722 = vpack.c.b16 %v548, %v545
    %v723 = vpack.c.b16 %v549, %v546
    %v724 = vpack.c.b16 %v553, %v550
    %v725 = vpack.c.b16 %v554, %v551
    %v726 = vpack.c.b16 %v555, %v552
    %v727 = vpack.c.b16 %v559, %v556
    %v728 = vpack.c.b16 %v560, %v557
    %v729 = vpack.c.b16 %v561, %v558
    %v730 = vpack.c.b16 %v565, %v562
    %v731 = vpack.c.b16 %v566, %v563
    %v732 = vpack.c.b16 %v567, %v564
    %v733 = vpack.c.b16 %v571, %v568
    %v734 = vpack.c.b16 %v572, %v569
    %v735 = vpack.c.b16 %v573, %v570
    %v736 = vpack.c.b16 %v577, %v574
    %v737 = vpack.c.b16 %v578, %v575
    %v738 = vpack.c.b16 %v579, %v576
    %v739 = vpack.c.b16 %v583, %v580
    %v740 = vpack.c.b16 %v584, %v581
    %v741 = vpack.c.b16 %v585, %v582
    %v742 = vpack.c.b16 %v589, %v586
    %v743 = vpack.c.b16 %v590, %v587
    %v744 = vpack.c.b16 %v591, %v588
    %v745 = vpack.c.b16 %v595, %v592
    %v746 = vpack.c.b16 %v596, %v593
    %v747 = vpack.c.b16 %v597, %v594
    %v748 = vpack.c.b16 %v601, %v598
    %v749 = vpack.c.b16 %v602, %v599
    %v750 = vpack.c.b16 %v603, %v600
    %v751 = vpack.c.b16 %v607, %v604
    %v752 = vpack.c.b16 %v608, %v605
    %v753 = vpack.c.b16 %v609, %v606
    %v754 = vpack.c.b16 %v613, %v610
    %v755 = vpack.c.b16 %v614, %v611
    %v756 = vpack.c.b16 %v615, %v612
    %v757 = vpack.c.b16 %v619, %v616
    %v758 = vpack.c.b16 %v620, %v617
    %v759 = vpack.c.b16 %v621, %v618
    %v760 = vpack.c.b16 %v625, %v622
    %v761 = vpack.c.b16 %v626, %v623
    %v762 = vpack.c.b16 %v627, %v624
    %v763 = vpack.c.b16 %v631, %v628
    %v764 = vpack.c.b16 %v632, %v629
    %v765 = vpack.c.b16 %v633, %v630
    %v766 = vpack.c.b16 %v637, %v634
    %v767 = vpack.c.b16 %v638, %v635
    %v768 = vpack.c.b16 %v639, %v636
    %v769 = vpack.c.b16 %v643, %v640
    %v770 = vpack.c.b16 %v644, %v641
    %v771 = vpack.c.b16 %v645, %v642
    %v772 = vpack.c.b16 %v649, %v646
    %v773 = vpack.c.b16 %v650, %v647
    %v774 = vpack.c.b16 %v651, %v648
    %v775 = vpack.c.b16 %v655, %v652
    %v776 = vpack.c.b16 %v656, %v653
    %v777 = vpack.c.b16 %v657, %v654
    %v778 = vpack.c.b16 %v661, %v658
    %v779 = vpack.c.b16 %v662, %v659
    %v780 = vpack.c.b16 %v663, %v660
    %v781 = vpack.c.b16 %v667, %v664
    %v782 = vpack.c.b16 %v668, %v665
    %v783 = vpack.c.b16 %v669, %v666
    %v784 = vpack.c.b16 %v673, %v670
    %v785 = vpack.c.b16 %v674, %v671
    %v786 = vpack.c.b16 %v675, %v672
    %v787 = vpack.c.b16 %v679, %v676
    %v788 = vpack.c.b16 %v680, %v677
    %v789 = vpack.c.b16 %v681, %v678
    %v790 = vpack.c.b16 %v685, %v682
    %v791 = vpack.c.b16 %v686, %v683
    %v792 = vpack.c.b16 %v687, %v684
    %v793 = vpack.c.b16 %v691, %v688
    %v794 = vpack.c.b16 %v692, %v689
    %v795 = vpack.c.b16 %v693, %v690
    %v796 = vpack.c.b16 %v697, %v694
    %v797 = vpack.c.b16 %v698, %v695
    %v798 = vpack.c.b16 %v699, %v696
    %v799 = vpack.c.b16 %v703, %v700
    %v800 = vpack.c.b16 %v704, %v701
    %v801 = vpack.c.b16 %v705, %v702
    %898 = vmatprep.subr.bf16.mxu0 %v707
    %899 = vmatpush1.bf16.msra.mxu0 %v706
    %900 = vmatprep.subr.bf16.mxu0 %v710
    %901 = vmatpush1.bf16.msra.mxu0 %v709
    %902 = vmatprep.subr.bf16.mxu0 %v713
    %903 = vmatpush1.bf16.msra.mxu0 %v712
    %904 = vmatprep.subr.bf16.mxu0 %v716
    %905 = vmatpush1.bf16.msra.mxu0 %v715
    %906 = vmatprep.subr.bf16.mxu0 %v719
    %907 = vmatpush1.bf16.msra.mxu0 %v718
    %908 = vmatprep.subr.bf16.mxu0 %v722
    %909 = vmatpush1.bf16.msra.mxu0 %v721
    %910 = vmatprep.subr.bf16.mxu0 %v725
    %911 = vmatpush1.bf16.msra.mxu0 %v724
    %912 = vmatprep.subr.bf16.mxu0 %v728
    %913 = vmatpush1.bf16.msra.mxu0 %v727
    %914 = vmatprep.subr.bf16.mxu0 %v731
    %915 = vmatpush1.bf16.msra.mxu0 %v730
    %916 = vmatprep.subr.bf16.mxu0 %v734
    %917 = vmatpush1.bf16.msra.mxu0 %v733
    %918 = vmatprep.subr.bf16.mxu0 %v737
    %919 = vmatpush1.bf16.msra.mxu0 %v736
    %920 = vmatprep.subr.bf16.mxu0 %v740
    %921 = vmatpush1.bf16.msra.mxu0 %v739
    %922 = vmatprep.subr.bf16.mxu0 %v743
    %923 = vmatpush1.bf16.msra.mxu0 %v742
    %924 = vmatprep.subr.bf16.mxu0 %v746
    %925 = vmatpush1.bf16.msra.mxu0 %v745
    %926 = vmatprep.subr.bf16.mxu0 %v749
    %927 = vmatpush1.bf16.msra.mxu0 %v748
    %928 = vmatprep.subr.bf16.mxu0 %v752
    %929 = vmatpush1.bf16.msra.mxu0 %v751
    %930 = vmatprep.mubr.bf16.mxu0 %v238
    %931 = vmatmul.mubr.bf16.gmra.mrb[0].mxu0 %v237
    %v932 = vpop.f32.mrb[0].mxu0
    %v933 = vadd.f32 %v374, %v932
    %v934 = vpop.f32.mrb[0].mxu0
    %v935 = vadd.f32 %v378, %v934
    %v936 = vpop.f32.mrb[0].mxu0
    %v937 = vpop.f32.mrb[0].mxu0
    %938 = vdwg.mxu0
    %939 = vmatprep.subr.bf16.mxu0 %v755
    %940 = vmatpush1.bf16.msra.mxu0 %v754
    %941 = vmatprep.subr.bf16.mxu0 %v758
    %942 = vmatpush1.bf16.msra.mxu0 %v757
    %943 = vmatprep.subr.bf16.mxu0 %v761
    %944 = vmatpush1.bf16.msra.mxu0 %v760
    %945 = vmatprep.subr.bf16.mxu0 %v764
    %946 = vmatpush1.bf16.msra.mxu0 %v763
    %947 = vmatprep.subr.bf16.mxu0 %v767
    %948 = vmatpush1.bf16.msra.mxu0 %v766
    %949 = vmatprep.subr.bf16.mxu0 %v770
    %950 = vmatpush1.bf16.msra.mxu0 %v769
    %951 = vmatprep.subr.bf16.mxu0 %v773
    %952 = vmatpush1.bf16.msra.mxu0 %v772
    %953 = vmatprep.subr.bf16.mxu0 %v776
    %954 = vmatpush1.bf16.msra.mxu0 %v775
    %955 = vmatprep.subr.bf16.mxu0 %v779
    %956 = vmatpush1.bf16.msra.mxu0 %v778
    %957 = vmatprep.subr.bf16.mxu0 %v782
    %958 = vmatpush1.bf16.msra.mxu0 %v781
    %959 = vmatprep.subr.bf16.mxu0 %v785
    %960 = vmatpush1.bf16.msra.mxu0 %v784
    %961 = vmatprep.subr.bf16.mxu0 %v788
    %962 = vmatpush1.bf16.msra.mxu0 %v787
    %963 = vmatprep.subr.bf16.mxu0 %v791
    %964 = vmatpush1.bf16.msra.mxu0 %v790
    %965 = vmatprep.subr.bf16.mxu0 %v794
    %966 = vmatpush1.bf16.msra.mxu0 %v793
    %967 = vmatprep.subr.bf16.mxu0 %v797
    %968 = vmatpush1.bf16.msra.mxu0 %v796
    %969 = vmatprep.subr.bf16.mxu0 %v800
    %970 = vmatpush1.bf16.msra.mxu0 %v799
    %971 = vmatprep.mubr.bf16.mxu0 %v240
    %972 = vmatmul.mubr.bf16.gmra.mrb[0].mxu0 %v239
    %v973 = vpop.f32.mrb[0].mxu0
    %v974 = vadd.f32 %v933, %v973
    %v975 = vpop.f32.mrb[0].mxu0
    %v976 = vadd.f32 %v935, %v975
    %v977 = vpop.f32.mrb[0].mxu0
    %v978 = vpop.f32.mrb[0].mxu0
    %979 = vdwg.mxu0
    %980 = vmatprep.subr.bf16.mxu0 0
    %981 = vmatpush1.bf16.msra.mxu0 %v708
    %982 = vmatprep.subr.bf16.mxu0 0
    %983 = vmatpush1.bf16.msra.mxu0 %v711
    %984 = vmatprep.subr.bf16.mxu0 0
    %985 = vmatpush1.bf16.msra.mxu0 %v714
    %986 = vmatprep.subr.bf16.mxu0 0
    %987 = vmatpush1.bf16.msra.mxu0 %v717
    %988 = vmatprep.subr.bf16.mxu0 0
    %989 = vmatpush1.bf16.msra.mxu0 %v720
    %990 = vmatprep.subr.bf16.mxu0 0
    %991 = vmatpush1.bf16.msra.mxu0 %v723
    %992 = vmatprep.subr.bf16.mxu0 0
    %993 = vmatpush1.bf16.msra.mxu0 %v726
    %994 = vmatprep.subr.bf16.mxu0 0
    %995 = vmatpush1.bf16.msra.mxu0 %v729
    %996 = vmatprep.subr.bf16.mxu0 0
    %997 = vmatpush1.bf16.msra.mxu0 %v732
    %998 = vmatprep.subr.bf16.mxu0 0
    %999 = vmatpush1.bf16.msra.mxu0 %v735
    %1000 = vmatprep.subr.bf16.mxu0 0
    %1001 = vmatpush1.bf16.msra.mxu0 %v738
    %1002 = vmatprep.subr.bf16.mxu0 0
    %1003 = vmatpush1.bf16.msra.mxu0 %v741
    %1004 = vmatprep.subr.bf16.mxu0 0
    %1005 = vmatpush1.bf16.msra.mxu0 %v744
    %1006 = vmatprep.subr.bf16.mxu0 0
    %1007 = vmatpush1.bf16.msra.mxu0 %v747
    %1008 = vmatprep.subr.bf16.mxu0 0
    %1009 = vmatpush1.bf16.msra.mxu0 %v750
    %1010 = vmatprep.subr.bf16.mxu0 0
    %1011 = vmatpush1.bf16.msra.mxu0 %v753
    %1012 = vmatprep.mubr.bf16.mxu0 %v238
    %1013 = vmatmul.mubr.bf16.gmra.mrb[0].mxu0 %v237
    %v1014 = vpop.f32.mrb[0].mxu0
    %v1015 = vadd.f32 %v382, %v1014
    %v1016 = vpop.f32.mrb[0].mxu0
    %v1017 = vpop.f32.mrb[0].mxu0
    %v1018 = vpop.f32.mrb[0].mxu0
    %1019 = vdwg.mxu0
    %1020 = vmatprep.subr.bf16.mxu0 0
    %1021 = vmatpush1.bf16.msra.mxu0 %v756
    %1022 = vmatprep.subr.bf16.mxu0 0
    %1023 = vmatpush1.bf16.msra.mxu0 %v759
    %1024 = vmatprep.subr.bf16.mxu0 0
    %1025 = vmatpush1.bf16.msra.mxu0 %v762
    %1026 = vmatprep.subr.bf16.mxu0 0
    %1027 = vmatpush1.bf16.msra.mxu0 %v765
    %1028 = vmatprep.subr.bf16.mxu0 0
    %1029 = vmatpush1.bf16.msra.mxu0 %v768
    %1030 = vmatprep.subr.bf16.mxu0 0
    %1031 = vmatpush1.bf16.msra.mxu0 %v771
    %1032 = vmatprep.subr.bf16.mxu0 0
    %1033 = vmatpush1.bf16.msra.mxu0 %v774
    %1034 = vmatprep.subr.bf16.mxu0 0
    %1035 = vmatpush1.bf16.msra.mxu0 %v777
    %1036 = vmatprep.subr.bf16.mxu0 0
    %1037 = vmatpush1.bf16.msra.mxu0 %v780
    %1038 = vmatprep.subr.bf16.mxu0 0
    %1039 = vmatpush1.bf16.msra.mxu0 %v783
    %1040 = vmatprep.subr.bf16.mxu0 0
    %1041 = vmatpush1.bf16.msra.mxu0 %v786
    %1042 = vmatprep.subr.bf16.mxu0 0
    %1043 = vmatpush1.bf16.msra.mxu0 %v789
    %1044 = vmatprep.subr.bf16.mxu0 0
    %1045 = vmatpush1.bf16.msra.mxu0 %v792
    %1046 = vmatprep.subr.bf16.mxu0 0
    %1047 = vmatpush1.bf16.msra.mxu0 %v795
    %1048 = vmatprep.subr.bf16.mxu0 0
    %1049 = vmatpush1.bf16.msra.mxu0 %v798
    %1050 = vmatprep.subr.bf16.mxu0 0
    %1051 = vmatpush1.bf16.msra.mxu0 %v801
    %1052 = vmatprep.mubr.bf16.mxu0 %v240
    %1053 = vmatmul.mubr.bf16.gmra.mrb[0].mxu0 %v239
    %v1054 = vpop.f32.mrb[0].mxu0
    %v1055 = vadd.f32 %v1015, %v1054
    %v1056 = vpop.f32.mrb[0].mxu0
    %v1057 = vpop.f32.mrb[0].mxu0
    %v1058 = vpop.f32.mrb[0].mxu0
    %1059 = vdwg.mxu0
    %v1060 = vmax.f32 %v974, 0.0
    %v1061 = vmax.f32 %v976, 0.0
    %v1062 = vmax.f32 %v1055, 0.0
    %v1063 = vpack.c.bf16 %v1060, %v1060
    %v1064 = vpack.c.bf16 %v1061, %v1061
    %v1065 = vpack.c.bf16 %v1062, %v1062
    %v1066 = vld [vmem:[#allocation8] sm:$0xf]
    %v1067 = vld [vmem:[#allocation8 + $0x4] sm:$0xf]
    %v1068 = vld [vmem:[#allocation8 + $0x8] sm:$0xf]
    %v1069 = vld [vmem:[#allocation8 + $0xc] sm:$0xf]
    %v1070 = vld [vmem:[#allocation8 + $0x10] sm:$0xf]
    %v1071 = vld [vmem:[#allocation8 + $0x14] sm:$0xf]
    %v1072 = vld [vmem:[#allocation8 + $0x18] sm:$0xf]
    %v1073 = vld [vmem:[#allocation8 + $0x1c] sm:$0xf]
    %v1074 = vld [vmem:[#allocation8 + $0x20] sm:$0xf]
    %v1075 = vld [vmem:[#allocation8 + $0x24] sm:$0xf]
    %v1076 = vld [vmem:[#allocation8 + $0x28] sm:$0xf]
    %v1077 = vld [vmem:[#allocation8 + $0x2c] sm:$0xf]
    %v1078 = vld [vmem:[#allocation8 + $0x30] sm:$0xf]
    %v1079 = vld [vmem:[#allocation8 + $0x34] sm:$0xf]
    %v1080 = vld [vmem:[#allocation8 + $0x38] sm:$0xf]
    %v1081 = vld [vmem:[#allocation8 + $0x3c] sm:$0xf]
    %v1082 = vld [vmem:[#allocation8 + $0x40] sm:$0xf]
    %v1083 = vld [vmem:[#allocation8 + $0x44] sm:$0xf]
    %v1084 = vld [vmem:[#allocation8 + $0x48] sm:$0xf]
    %v1085 = vld [vmem:[#allocation8 + $0x4c] sm:$0xf]
    %v1086 = vld [vmem:[#allocation8 + $0x50] sm:$0xf]
    %v1087 = vld [vmem:[#allocation8 + $0x54] sm:$0xf]
    %v1088 = vld [vmem:[#allocation8 + $0x58] sm:$0xf]
    %v1089 = vld [vmem:[#allocation8 + $0x5c] sm:$0xf]
    %v1090 = vld [vmem:[#allocation8 + $0x60] sm:$0xf]
    %v1091 = vld [vmem:[#allocation8 + $0x64] sm:$0xf]
    %v1092 = vld [vmem:[#allocation8 + $0x68] sm:$0xf]
    %v1093 = vld [vmem:[#allocation8 + $0x6c] sm:$0xf]
    %v1094 = vld [vmem:[#allocation8 + $0x70] sm:$0xf]
    %v1095 = vld [vmem:[#allocation8 + $0x74] sm:$0xf]
    %v1096 = vld [vmem:[#allocation8 + $0x78] sm:$0xf]
    %v1097 = vld [vmem:[#allocation8 + $0x7c] sm:$0xf]
    %v1098 = vld [vmem:[#allocation8 + $0x80] sm:$0xf]
    %v1099 = vld [vmem:[#allocation8 + $0x84] sm:$0xf]
    %v1100 = vld [vmem:[#allocation8 + $0x88] sm:$0xf]
    %v1101 = vld [vmem:[#allocation8 + $0x8c] sm:$0xf]
    %v1102 = vld [vmem:[#allocation8 + $0x90] sm:$0xf]
    %v1103 = vld [vmem:[#allocation8 + $0x94] sm:$0xf]
    %v1104 = vld [vmem:[#allocation8 + $0x98] sm:$0xf]
    %v1105 = vld [vmem:[#allocation8 + $0x9c] sm:$0xf]
    %v1106 = vld [vmem:[#allocation8 + $0xa0] sm:$0xf]
    %v1107 = vld [vmem:[#allocation8 + $0xa4] sm:$0xf]
    %v1108 = vld [vmem:[#allocation8 + $0xa8] sm:$0xf]
    %v1109 = vld [vmem:[#allocation8 + $0xac] sm:$0xf]
    %v1110 = vld [vmem:[#allocation8 + $0xb0] sm:$0xf]
    %v1111 = vld [vmem:[#allocation8 + $0xb4] sm:$0xf]
    %v1112 = vld [vmem:[#allocation8 + $0xb8] sm:$0xf]
    %v1113 = vld [vmem:[#allocation8 + $0xbc] sm:$0xf]
    %v1114 = vld [vmem:[%s6] sm:$0x1]
    %v1116 = vlaneseq
    %v1117 = vshrl.u32 %v1116, 7
    %v1118 = vsub.s32 0, %v1117
    %v1119 = vrot.slane %v1114, %v1118
    %v1169 = vunpack.c.l.b16 %v1066
    %v1170 = vunpack.c.l.b16 %v1067
    %v1171 = vunpack.c.l.b16 %v1068
    %v1172 = vunpack.c.l.b16 %v1069
    %v1173 = vunpack.c.l.b16 %v1070
    %v1174 = vunpack.c.l.b16 %v1071
    %v1175 = vunpack.c.l.b16 %v1072
    %v1176 = vunpack.c.l.b16 %v1073
    %v1177 = vunpack.c.l.b16 %v1074
    %v1178 = vunpack.c.l.b16 %v1075
    %v1179 = vunpack.c.l.b16 %v1076
    %v1180 = vunpack.c.l.b16 %v1077
    %v1181 = vunpack.c.l.b16 %v1078
    %v1182 = vunpack.c.l.b16 %v1079
    %v1183 = vunpack.c.l.b16 %v1080
    %v1184 = vunpack.c.l.b16 %v1081
    %v1185 = vunpack.c.l.b16 %v1082
    %v1186 = vunpack.c.l.b16 %v1083
    %v1187 = vunpack.c.l.b16 %v1084
    %v1188 = vunpack.c.l.b16 %v1085
    %v1189 = vunpack.c.l.b16 %v1086
    %v1190 = vunpack.c.l.b16 %v1087
    %v1191 = vunpack.c.l.b16 %v1088
    %v1192 = vunpack.c.l.b16 %v1089
    %v1193 = vunpack.c.l.b16 %v1090
    %v1194 = vunpack.c.l.b16 %v1091
    %v1195 = vunpack.c.l.b16 %v1092
    %v1196 = vunpack.c.l.b16 %v1093
    %v1197 = vunpack.c.l.b16 %v1094
    %v1198 = vunpack.c.l.b16 %v1095
    %v1199 = vunpack.c.l.b16 %v1096
    %v1200 = vunpack.c.l.b16 %v1097
    %v1201 = vunpack.c.l.b16 %v1098
    %v1202 = vunpack.c.l.b16 %v1099
    %v1203 = vunpack.c.l.b16 %v1100
    %v1204 = vunpack.c.l.b16 %v1101
    %v1205 = vunpack.c.l.b16 %v1102
    %v1206 = vunpack.c.l.b16 %v1103
    %v1207 = vunpack.c.l.b16 %v1104
    %v1208 = vunpack.c.l.b16 %v1105
    %v1209 = vunpack.c.l.b16 %v1106
    %v1210 = vunpack.c.l.b16 %v1107
    %v1211 = vunpack.c.l.b16 %v1108
    %v1212 = vunpack.c.l.b16 %v1109
    %v1213 = vunpack.c.l.b16 %v1110
    %v1214 = vunpack.c.l.b16 %v1111
    %v1215 = vunpack.c.l.b16 %v1112
    %v1216 = vunpack.c.l.b16 %v1113
    %v1217 = vpack.c.b16 %v1170, %v1169
    %v1218 = vpack.c.b16 %v1172, %v1171
    %v1219 = vpack.c.b16 %v1174, %v1173
    %v1220 = vpack.c.b16 %v1176, %v1175
    %v1221 = vpack.c.b16 %v1178, %v1177
    %v1222 = vpack.c.b16 %v1180, %v1179
    %v1223 = vpack.c.b16 %v1182, %v1181
    %v1224 = vpack.c.b16 %v1184, %v1183
    %v1225 = vpack.c.b16 %v1186, %v1185
    %v1226 = vpack.c.b16 %v1188, %v1187
    %v1227 = vpack.c.b16 %v1190, %v1189
    %v1228 = vpack.c.b16 %v1192, %v1191
    %v1229 = vpack.c.b16 %v1194, %v1193
    %v1230 = vpack.c.b16 %v1196, %v1195
    %v1231 = vpack.c.b16 %v1198, %v1197
    %v1232 = vpack.c.b16 %v1200, %v1199
    %v1233 = vpack.c.b16 %v1202, %v1201
    %v1234 = vpack.c.b16 %v1204, %v1203
    %v1235 = vpack.c.b16 %v1206, %v1205
    %v1236 = vpack.c.b16 %v1208, %v1207
    %v1237 = vpack.c.b16 %v1210, %v1209
    %v1238 = vpack.c.b16 %v1212, %v1211
    %v1239 = vpack.c.b16 %v1214, %v1213
    %v1240 = vpack.c.b16 %v1216, %v1215
    %1265 = vmatprep.subr.bf16.mxu0 0
    %1266 = vmatpush1.bf16.msra.mxu0 %v1217
    %1267 = vmatprep.subr.bf16.mxu0 0
    %1268 = vmatpush1.bf16.msra.mxu0 %v1218
    %1269 = vmatprep.subr.bf16.mxu0 0
    %1270 = vmatpush1.bf16.msra.mxu0 %v1219
    %1271 = vmatprep.subr.bf16.mxu0 0
    %1272 = vmatpush1.bf16.msra.mxu0 %v1220
    %1273 = vmatprep.subr.bf16.mxu0 0
    %1274 = vmatpush1.bf16.msra.mxu0 %v1221
    %1275 = vmatprep.subr.bf16.mxu0 0
    %1276 = vmatpush1.bf16.msra.mxu0 %v1222
    %1277 = vmatprep.subr.bf16.mxu0 0
    %1278 = vmatpush1.bf16.msra.mxu0 %v1223
    %1279 = vmatprep.subr.bf16.mxu0 0
    %1280 = vmatpush1.bf16.msra.mxu0 %v1224
    %1281 = vmatprep.subr.bf16.mxu0 0
    %1282 = vmatpush1.bf16.msra.mxu0 %v1225
    %1283 = vmatprep.subr.bf16.mxu0 0
    %1284 = vmatpush1.bf16.msra.mxu0 %v1226
    %1285 = vmatprep.subr.bf16.mxu0 0
    %1286 = vmatpush1.bf16.msra.mxu0 %v1227
    %1287 = vmatprep.subr.bf16.mxu0 0
    %1288 = vmatpush1.bf16.msra.mxu0 %v1228
    %1289 = vmatprep.subr.bf16.mxu0 0
    %1290 = vmatpush1.bf16.msra.mxu0 %v1229
    %1291 = vmatprep.subr.bf16.mxu0 0
    %1292 = vmatpush1.bf16.msra.mxu0 %v1230
    %1293 = vmatprep.subr.bf16.mxu0 0
    %1294 = vmatpush1.bf16.msra.mxu0 %v1231
    %1295 = vmatprep.subr.bf16.mxu0 0
    %1296 = vmatpush1.bf16.msra.mxu0 %v1232
    %1297 = vmatprep.mubr.bf16.mxu0 %v1064
    %1298 = vmatmul.mubr.bf16.gmra.mrb[0].mxu0 %v1063
    %v1299 = vpop.f32.mrb[0].mxu0
    %v1300 = vadd.f32 %v1119, %v1299
    %v1301 = vpop.f32.mrb[0].mxu0
    %v1302 = vpop.f32.mrb[0].mxu0
    %v1303 = vpop.f32.mrb[0].mxu0
    %1304 = vdwg.mxu0
    %1305 = vmatprep.subr.bf16.mxu0 0
    %1306 = vmatpush1.bf16.msra.mxu0 %v1233
    %1307 = vmatprep.subr.bf16.mxu0 0
    %1308 = vmatpush1.bf16.msra.mxu0 %v1234
    %1309 = vmatprep.subr.bf16.mxu0 0
    %1310 = vmatpush1.bf16.msra.mxu0 %v1235
    %1311 = vmatprep.subr.bf16.mxu0 0
    %1312 = vmatpush1.bf16.msra.mxu0 %v1236
    %1313 = vmatprep.subr.bf16.mxu0 0
    %1314 = vmatpush1.bf16.msra.mxu0 %v1237
    %1315 = vmatprep.subr.bf16.mxu0 0
    %1316 = vmatpush1.bf16.msra.mxu0 %v1238
    %1317 = vmatprep.subr.bf16.mxu0 0
    %1318 = vmatpush1.bf16.msra.mxu0 %v1239
    %1319 = vmatprep.subr.bf16.mxu0 0
    %1320 = vmatpush1.bf16.msra.mxu0 %v1240
    %1321 = vmatprep.subr.bf16.mxu0 0
    %1322 = vmatpush1.bf16.msra.mxu0 0
    %1323 = vmatprep.subr.bf16.mxu0 0
    %1324 = vmatpush1.bf16.msra.mxu0 0
    %1325 = vmatprep.subr.bf16.mxu0 0
    %1326 = vmatpush1.bf16.msra.mxu0 0
    %1327 = vmatprep.subr.bf16.mxu0 0
    %1328 = vmatpush1.bf16.msra.mxu0 0
    %1329 = vmatprep.subr.bf16.mxu0 0
    %1330 = vmatpush1.bf16.msra.mxu0 0
    %1331 = vmatprep.subr.bf16.mxu0 0
    %1332 = vmatpush1.bf16.msra.mxu0 0
    %1333 = vmatprep.subr.bf16.mxu0 0
    %1334 = vmatpush1.bf16.msra.mxu0 0
    %1335 = vmatprep.subr.bf16.mxu0 0
    %1336 = vmatpush1.bf16.msra.mxu0 0
    %1337 = vmatprep.mubr.bf16.mxu0 0
    %1338 = vmatmul.mubr.bf16.gmra.mrb[0].mxu0 %v1065
    %v1339 = vpop.f32.mrb[0].mxu0
    %v1340 = vadd.f32 %v1300, %v1339
    %v1341 = vpop.f32.mrb[0].mxu0
    %v1342 = vpop.f32.mrb[0].mxu0
    %v1343 = vpop.f32.mrb[0].mxu0
    %1344 = vdwg.mxu0
    %v1345 = vxor.u32 %v1340, 2147483648
    %v1346 = vmul.f32 %v1345, 1.442695
    %v1347 = vpow.pop %v1346
    %v1348 = vadd.f32 %v1347, 1.0
    %v1349 = vrcp.pop %v1348
    %v1350 = vmul.f32 1.0, %v1349
    %v1351 = vpack.c.bf16 %v1350, %v1350
    %v1352 = vld [vmem:[#allocation10] sm:$0xf]
    %v1353 = vld [vmem:[#allocation10 + $0x4] sm:$0xf]
    %v1354 = vld [vmem:[#allocation10 + $0x8] sm:$0xf]
    %v1355 = vld [vmem:[#allocation10 + $0xc] sm:$0xf]
    %v1356 = vld [vmem:[#allocation10 + $0x10] sm:$0xf]
    %v1357 = vld [vmem:[#allocation10 + $0x14] sm:$0xf]
    %v1358 = vld [vmem:[#allocation10 + $0x18] sm:$0xf]
    %v1359 = vld [vmem:[#allocation10 + $0x1c] sm:$0xf]
    %v1360 = vld [vmem:[#allocation10 + $0x20] sm:$0xf]
    %v1361 = vld [vmem:[#allocation10 + $0x24] sm:$0xf]
    %v1362 = vld [vmem:[#allocation10 + $0x28] sm:$0xf]
    %v1363 = vld [vmem:[#allocation10 + $0x2c] sm:$0xf]
    %v1364 = vld [vmem:[#allocation10 + $0x30] sm:$0xf]
    %v1365 = vld [vmem:[#allocation10 + $0x34] sm:$0xf]
    %v1366 = vld [vmem:[#allocation10 + $0x38] sm:$0xf]
    %v1367 = vld [vmem:[#allocation10 + $0x3c] sm:$0xf]
    %v1368 = vld [vmem:[%s8] sm:$0x1]
    %v1370 = vlaneseq
    %v1371 = vshrl.u32 %v1370, 7
    %v1372 = vsub.s32 0, %v1371
    %v1373 = vrot.slane %v1368, %v1372
    %v1391 = vunpack.c.l.b16 %v1352
    %v1392 = vunpack.c.l.b16 %v1353
    %v1393 = vunpack.c.l.b16 %v1354
    %v1394 = vunpack.c.l.b16 %v1355
    %v1395 = vunpack.c.l.b16 %v1356
    %v1396 = vunpack.c.l.b16 %v1357
    %v1397 = vunpack.c.l.b16 %v1358
    %v1398 = vunpack.c.l.b16 %v1359
    %v1399 = vunpack.c.l.b16 %v1360
    %v1400 = vunpack.c.l.b16 %v1361
    %v1401 = vunpack.c.l.b16 %v1362
    %v1402 = vunpack.c.l.b16 %v1363
    %v1403 = vunpack.c.l.b16 %v1364
    %v1404 = vunpack.c.l.b16 %v1365
    %v1405 = vunpack.c.l.b16 %v1366
    %v1406 = vunpack.c.l.b16 %v1367
    %v1407 = vpack.c.b16 %v1392, %v1391
    %v1408 = vpack.c.b16 %v1394, %v1393
    %v1409 = vpack.c.b16 %v1396, %v1395
    %v1410 = vpack.c.b16 %v1398, %v1397
    %v1411 = vpack.c.b16 %v1400, %v1399
    %v1412 = vpack.c.b16 %v1402, %v1401
    %v1413 = vpack.c.b16 %v1404, %v1403
    %v1414 = vpack.c.b16 %v1406, %v1405
    %1423 = vmatprep.subr.bf16.mxu0 0
    %1424 = vmatpush1.bf16.msra.mxu0 %v1407
    %1425 = vmatprep.subr.bf16.mxu0 0
    %1426 = vmatpush1.bf16.msra.mxu0 %v1408
    %1427 = vmatprep.subr.bf16.mxu0 0
    %1428 = vmatpush1.bf16.msra.mxu0 %v1409
    %1429 = vmatprep.subr.bf16.mxu0 0
    %1430 = vmatpush1.bf16.msra.mxu0 %v1410
    %1431 = vmatprep.subr.bf16.mxu0 0
    %1432 = vmatpush1.bf16.msra.mxu0 %v1411
    %1433 = vmatprep.subr.bf16.mxu0 0
    %1434 = vmatpush1.bf16.msra.mxu0 %v1412
    %1435 = vmatprep.subr.bf16.mxu0 0
    %1436 = vmatpush1.bf16.msra.mxu0 %v1413
    %1437 = vmatprep.subr.bf16.mxu0 0
    %1438 = vmatpush1.bf16.msra.mxu0 %v1414
    %1439 = vmatprep.subr.bf16.mxu0 0
    %1440 = vmatpush1.bf16.msra.mxu0 0
    %1441 = vmatprep.subr.bf16.mxu0 0
    %1442 = vmatpush1.bf16.msra.mxu0 0
    %1443 = vmatprep.subr.bf16.mxu0 0
    %1444 = vmatpush1.bf16.msra.mxu0 0
    %1445 = vmatprep.subr.bf16.mxu0 0
    %1446 = vmatpush1.bf16.msra.mxu0 0
    %1447 = vmatprep.subr.bf16.mxu0 0
    %1448 = vmatpush1.bf16.msra.mxu0 0
    %1449 = vmatprep.subr.bf16.mxu0 0
    %1450 = vmatpush1.bf16.msra.mxu0 0
    %1451 = vmatprep.subr.bf16.mxu0 0
    %1452 = vmatpush1.bf16.msra.mxu0 0
    %1453 = vmatprep.subr.bf16.mxu0 0
    %1454 = vmatpush1.bf16.msra.mxu0 0
    %1455 = vmatprep.mubr.bf16.mxu0 0
    %1456 = vmatmul.mubr.bf16.gmra.mrb[0].mxu0 %v1351
    %v1457 = vpop.f32.mrb[0].mxu0
    %v1458 = vadd.f32 %v1373, %v1457
    %v1459 = vpop.f32.mrb[0].mxu0
    %v1460 = vpop.f32.mrb[0].mxu0
    %v1461 = vpop.f32.mrb[0].mxu0
    %1462 = vdwg.mxu0
    %v1463 = vxor.u32 %v1458, 2147483648
    %v1464 = vmul.f32 %v1463, 1.442695
    %v1465 = vpow.pop %v1464
    %v1466 = vadd.f32 %v1465, 1.0
    %v1467 = vrcp.pop %v1466
    %v1468 = vmul.f32 1.0, %v1467
    %v1469 = vmul.f32 %v1468, 4.0
    %v1470 = vadd.f32 %v1469, -2.0
    %1471 = vst [vmem:[#allocation11] sm:$0xff] %v1470
    // Predicated region
    $region58: #{tpu_custom_call.1} parent=1 // pred_check
      _
    $region59: #{tpu_custom_call.1} parent=1 // pred_check_branch
      %1473 = sbr.rel (0) target = $region61
    $region60: #{tpu_custom_call.1} parent=1 // pred_region
      %s1475 = ssub.s32 128, 128
      %1476 = vsyncadd [#allocation4], %s1475
      %s1478 = sshll.u32 [#allocation11], 4
      %s1479 = int_to_ptr.vmem [resolvable:$true] %s1478
      %1481 = dma.vmem_to_hbm [thread:$0]  %s1479, 128, %s9, [#allocation4]
    $region61: #{tpu_custom_call.1} parent=1 // pred_fallthru
      _
    // Predicated region
    $region62: #{tpu_custom_call.1} parent=1 // pred_check
      _
    $region63: #{tpu_custom_call.1} parent=1 // pred_check_branch
      %1483 = sbr.rel (0) target = $region65
    $region64: #{tpu_custom_call.1} parent=1 // pred_region
      %1484 = dma.done [#allocation4], 128
    $region65: #{tpu_custom_call.1} parent=1 // pred_fallthru
      _
    %1485 = vsyncpa [#allocation3], 1
    %1486 = vsyncpa [#allocation6], 1
    %1487 = vsyncpa [#allocation9], 1
    %1488 = vsyncpa [#allocation4], 1

// kernel: tpu_custom_call.1
$region0: #{tpu_custom_call.1}
  #allocation0 [shape = 'u32[]', space=smem, size = 0x4, offset = 0x4, fixed_abs, tag = 'smem constant byte address 0x4 - core index']
  #allocation1 [shape = 'u32[144,128]{1,0:T(1,128)}', space=vmem, size = 0x12000, scoped, tag = 'internal scratch']
  %s0 = inlined_call_operand.hbm [shape: f32[8,8], index: 0, kind: input, shape index: {}]
  %s1 = inlined_call_operand.hbm [shape: bf16[8,512], index: 1, kind: input, shape index: {}]
  %s2 = inlined_call_operand.vmem [shape: f32[1,512], index: 2, kind: input, shape index: {}]
  %s3 = inlined_call_operand.hbm [shape: bf16[512,384], index: 3, kind: input, shape index: {}]
  %s4 = inlined_call_operand.vmem [shape: f32[1,384], index: 4, kind: input, shape index: {}]
  %s5 = inlined_call_operand.hbm [shape: bf16[384,128], index: 5, kind: input, shape index: {}]
  %s6 = inlined_call_operand.vmem [shape: f32[1,128], index: 6, kind: input, shape index: {}]
  %s7 = inlined_call_operand.hbm [shape: bf16[128,128], index: 7, kind: input, shape index: {}]
  %s8 = inlined_call_operand.vmem [shape: f32[1,128], index: 8, kind: input, shape index: {}]
  %s9 = inlined_call_operand.hbm [shape: f32[8,128], index: 9, kind: output, shape index: {}]
  %s10 = sld [smem:[#allocation0]]
  $region66: #{tpu_custom_call.1} parent=0
    _
  %s12 = ssub.s32 1, %s10
  %s13 = scalar_select 0, %s12, %s10
  $region1: #{tpu_custom_call.1} parent=0
    #allocation2 [shape = 'u8[4096]{0}', space=vmem, size = 0x1000, scoped, tag = 'input window, operand 0, single buffered']
    #allocation3 [shape = 's32[1]{0}', space=sflag, size = 0x4, scoped, tag = 'scoped memory for tpu_custom_call.1']
    #allocation4 [shape = 's32[1]{0}', space=sflag, size = 0x4, scoped, tag = 'scoped memory for tpu_custom_call.1']
    #allocation5 [shape = 'u8[8192]{0}', space=vmem, size = 0x2000, scoped, tag = 'input window, operand 1, single buffered']
    #allocation6 [shape = 's32[1]{0}', space=sflag, size = 0x4, scoped, tag = 'scoped memory for tpu_custom_call.1']
    #allocation7 [shape = 'u8[393216]{0}', space=vmem, size = 0x60000, scoped, tag = 'input window, operand 3, single buffered']
    #allocation8 [shape = 'u8[98304]{0}', space=vmem, size = 0x18000, scoped, tag = 'input window, operand 5, single buffered']
    #allocation9 [shape = 's32[1]{0}', space=sflag, size = 0x4, scoped, tag = 'scoped memory for tpu_custom_call.1']
    #allocation10 [shape = 'u8[32768]{0}', space=vmem, size = 0x8000, scoped, tag = 'input window, operand 7, single buffered']
    #allocation11 [shape = 'u8[4096]{0}', space=vmem, size = 0x1000, scoped, tag = 'output window, operand 0, single buffered']
    %14 = vsyncpa [#allocation3], 0
    %15 = vsyncpa [#allocation6], 0
    %16 = vsyncpa [#allocation9], 0
    %17 = vsyncpa [#allocation4], 0
    // Predicated region
    $region2: #{tpu_custom_call.1} parent=1 // pred_check
      _
    $region3: #{tpu_custom_call.1} parent=1 // pred_check_branch
      %19 = sbr.rel (0) target = $region5
    $region4: #{tpu_custom_call.1} parent=1 // pred_region
      %s21 = ssub.s32 128, 128
      %22 = vsyncadd [#allocation3], %s21
      %s24 = sshll.u32 [#allocation2], 4
      %s25 = int_to_ptr.vmem [resolvable:$true] %s24
      %27 = dma.hbm_to_vmem [thread:$0]  %s0, 128, %s25, [#allocation3]
    $region5: #{tpu_custom_call.1} parent=1 // pred_fallthru
      _
    // Predicated region
    $region6: #{tpu_custom_call.1} parent=1 // pred_check
      _
    $region7: #{tpu_custom_call.1} parent=1 // pred_check_branch
      %29 = sbr.rel (0) target = $region9
    $region8: #{tpu_custom_call.1} parent=1 // pred_region
      %s31 = ssub.s32 256, 256
      %32 = vsyncadd [#allocation6], %s31
      %s34 = sshll.u32 [#allocation5], 4
      %s35 = int_to_ptr.vmem [resolvable:$true] %s34
      %37 = dma.hbm_to_vmem [thread:$0]  %s1, 256, %s35, [#allocation6]
    $region9: #{tpu_custom_call.1} parent=1 // pred_fallthru
      _
    // Predicated region
    $region10: #{tpu_custom_call.1} parent=1 // pred_check
      _
    $region11: #{tpu_custom_call.1} parent=1 // pred_check_branch
      %39 = sbr.rel (0) target = $region13
    $region12: #{tpu_custom_call.1} parent=1 // pred_region
      _
    $region13: #{tpu_custom_call.1} parent=1 // pred_fallthru
      _
    // Predicated region
    $region14: #{tpu_custom_call.1} parent=1 // pred_check
      _
    $region15: #{tpu_custom_call.1} parent=1 // pred_check_branch
      %41 = sbr.rel (0) target = $region17
    $region16: #{tpu_custom_call.1} parent=1 // pred_region
      %s43 = ssub.s32 12288, 12288
      %44 = vsyncadd [#allocation6], %s43
      %s45 = sshll.u32 [#allocation7], 4
      %s46 = int_to_ptr.vmem [resolvable:$true] %s45
      %51 = dma.hbm_to_vmem [thread:$0]  %s3, 12288, %s46, [#allocation6], 192, 192, 12
    $region17: #{tpu_custom_call.1} parent=1 // pred_fallthru
      _
    // Predicated region
    $region18: #{tpu_custom_call.1} parent=1 // pred_check
      _
    $region19: #{tpu_custom_call.1} parent=1 // pred_check_branch
      %53 = sbr.rel (0) target = $region21
    $region20: #{tpu_custom_call.1} parent=1 // pred_region
      _
    $region21: #{tpu_custom_call.1} parent=1 // pred_fallthru
      _
    // Predicated region
    $region22: #{tpu_custom_call.1} parent=1 // pred_check
      _
    $region23: #{tpu_custom_call.1} parent=1 // pred_check_branch
      %55 = sbr.rel (0) target = $region25
    $region24: #{tpu_custom_call.1} parent=1 // pred_region
      %s57 = ssub.s32 3072, 3072
      %58 = vsyncadd [#allocation9], %s57
      %s59 = sshll.u32 [#allocation8], 4
      %s60 = int_to_ptr.vmem [resolvable:$true] %s59
      %65 = dma.hbm_to_vmem [thread:$0]  %s5, 3072, %s60, [#allocation9], 64, 64, 4
    $region25: #{tpu_custom_call.1} parent=1 // pred_fallthru
      _
    // Predicated region
    $region26: #{tpu_custom_call.1} parent=1 // pred_check
      _
    $region27: #{tpu_custom_call.1} parent=1 // pred_check_branch
      %67 = sbr.rel (0) target = $region29
    $region28: #{tpu_custom_call.1} parent=1 // pred_region
      _
    $region29: #{tpu_custom_call.1} parent=1 // pred_fallthru
      _
    // Predicated region
    $region30: #{tpu_custom_call.1} parent=1 // pred_check
      _
    $region31: #{tpu_custom_call.1} parent=1 // pred_check_branch
      %69 = sbr.rel (0) target = $region33
    $region32: #{tpu_custom_call.1} parent=1 // pred_region
      %s71 = ssub.s32 1024, 1024
      %72 = vsyncadd [#allocation9], %s71
      %s73 = sshll.u32 [#allocation10], 4
      %s74 = int_to_ptr.vmem [resolvable:$true] %s73
      %79 = dma.hbm_to_vmem [thread:$0]  %s7, 1024, %s74, [#allocation9], 64, 64, 4
    $region33: #{tpu_custom_call.1} parent=1 // pred_fallthru
      _
    // Predicated region
    $region34: #{tpu_custom_call.1} parent=1 // pred_check
      _
    $region35: #{tpu_custom_call.1} parent=1 // pred_check_branch
      %81 = sbr.rel (0) target = $region37
    $region36: #{tpu_custom_call.1} parent=1 // pred_region
      _
    $region37: #{tpu_custom_call.1} parent=1 // pred_fallthru
      _
    // Predicated region
    $region38: #{tpu_custom_call.1} parent=1 // pred_check
      _
    $region39: #{tpu_custom_call.1} parent=1 // pred_check_branch
      %83 = sbr.rel (0) target = $region41
    $region40: #{tpu_custom_call.1} parent=1 // pred_region
      %84 = dma.done [#allocation3], 128
    $region41: #{tpu_custom_call.1} parent=1 // pred_fallthru
      _
    // Predicated region
    $region42: #{tpu_custom_call.1} parent=1 // pred_check
      _
    $region43: #{tpu_custom_call.1} parent=1 // pred_check_branch
      %86 = sbr.rel (0) target = $region45
    $region44: #{tpu_custom_call.1} parent=1 // pred_region
      %87 = dma.done [#allocation6], 256
    $region45: #{tpu_custom_call.1} parent=1 // pred_fallthru
      _
    // Predicated region
    $region46: #{tpu_custom_call.1} parent=1 // pred_check
      _
    $region47: #{tpu_custom_call.1} parent=1 // pred_check_branch
      %89 = sbr.rel (0) target = $region49
    $region48: #{tpu_custom_call.1} parent=1 // pred_region
      %90 = dma.done [#allocation6], 12288
    $region49: #{tpu_custom_call.1} parent=1 // pred_fallthru
      _
    // Predicated region
    $region50: #{tpu_custom_call.1} parent=1 // pred_check
      _
    $region51: #{tpu_custom_call.1} parent=1 // pred_check_branch
      %92 = sbr.rel (0) target = $region53
    $region52: #{tpu_custom_call.1} parent=1 // pred_region
      %93 = dma.done [#allocation9], 3072
    $region53: #{tpu_custom_call.1} parent=1 // pred_fallthru
      _
    // Predicated region
    $region54: #{tpu_custom_call.1} parent=1 // pred_check
      _
    $region55: #{tpu_custom_call.1} parent=1 // pred_check_branch
      %95 = sbr.rel (0) target = $region57
    $region56: #{tpu_custom_call.1} parent=1 // pred_region
      %96 = dma.done [#allocation9], 1024
    $region57: #{tpu_custom_call.1} parent=1 // pred_fallthru
      _
    %v98 = vld [vmem:[#allocation2] sm:$0xff]
    %v99 = vpack.c.bf16 %v98, %v98
    %v100 = vld [vmem:[#allocation5] sm:$0xff]
    %v101 = vld [vmem:[#allocation5 + $0x8] sm:$0xff]
    %v102 = vld [vmem:[%s2] sm:$0xf]
    %v104 = vlaneseq
    %v105 = vshrl.u32 %v104, 7
    %v106 = vsub.s32 0, %v105
    %v107 = vrot.slane %v102, %v106
    %v108 = vlaneseq
    %v109 = vshrl.u32 %v108, 7
    %v110 = vsub.s32 1, %v109
    %v111 = vrot.slane %v102, %v110
    %v112 = vlaneseq
    %v113 = vshrl.u32 %v112, 7
    %v114 = vsub.s32 2, %v113
    %v115 = vrot.slane %v102, %v114
    %v116 = vlaneseq
    %v117 = vshrl.u32 %v116, 7
    %v118 = vsub.s32 3, %v117
    %v119 = vrot.slane %v102, %v118
    %v126 = vunpack.c.l.b16 %v100
    %v127 = vunpack.c.h.b16 %v100
    %v128 = vunpack.c.l.b16 %v101
    %v129 = vunpack.c.h.b16 %v101
    %v130 = vpack.c.b16 %v126, %v126
    %v131 = vpack.c.b16 %v127, %v127
    %v132 = vpack.c.b16 %v128, %v128
    %v133 = vpack.c.b16 %v129, %v129
    %vm134 = vcmask 64512
    %v136 = vsel %vm134, %v99, 0
    %vm138 = vcmask 1043456
    %v140 = vsel %vm138, %v130, 0
    %v143 = vsel %vm138, %v131, 0
    %v146 = vsel %vm138, %v132, 0
    %v149 = vsel %vm138, %v133, 0
    %151 = vmatprep.subr.bf16.mxu0 %v143
    %152 = vmatpush1.bf16.msra.mxu0 %v140
    %153 = vmatprep.subr.bf16.mxu0 0
    %154 = vmatpush1.bf16.msra.mxu0 0
    %155 = vmatprep.subr.bf16.mxu0 0
    %156 = vmatpush1.bf16.msra.mxu0 0
    %157 = vmatprep.subr.bf16.mxu0 0
    %158 = vmatpush1.bf16.msra.mxu0 0
    %159 = vmatprep.subr.bf16.mxu0 0
    %160 = vmatpush1.bf16.msra.mxu0 0
    %161 = vmatprep.subr.bf16.mxu0 0
    %162 = vmatpush1.bf16.msra.mxu0 0
    %163 = vmatprep.subr.bf16.mxu0 0
    %164 = vmatpush1.bf16.msra.mxu0 0
    %165 = vmatprep.subr.bf16.mxu0 0
    %166 = vmatpush1.bf16.msra.mxu0 0
    %167 = vmatprep.subr.bf16.mxu0 0
    %168 = vmatpush1.bf16.msra.mxu0 0
    %169 = vmatprep.subr.bf16.mxu0 0
    %170 = vmatpush1.bf16.msra.mxu0 0
    %171 = vmatprep.subr.bf16.mxu0 0
    %172 = vmatpush1.bf16.msra.mxu0 0
    %173 = vmatprep.subr.bf16.mxu0 0
    %174 = vmatpush1.bf16.msra.mxu0 0
    %175 = vmatprep.subr.bf16.mxu0 0
    %176 = vmatpush1.bf16.msra.mxu0 0
    %177 = vmatprep.subr.bf16.mxu0 0
    %178 = vmatpush1.bf16.msra.mxu0 0
    %179 = vmatprep.subr.bf16.mxu0 0
    %180 = vmatpush1.bf16.msra.mxu0 0
    %181 = vmatprep.subr.bf16.mxu0 0
    %182 = vmatpush1.bf16.msra.mxu0 0
    %183 = vmatprep.mubr.bf16.mxu0 0
    %184 = vmatmul.mubr.bf16.gmra.mrb[0].mxu0 %v136
    %v185 = vpop.f32.mrb[0].mxu0
    %v186 = vadd.f32 %v107, %v185
    %v187 = vpop.f32.mrb[0].mxu0
    %v188 = vadd.f32 %v111, %v187
    %v189 = vpop.f32.mrb[0].mxu0
    %v190 = vpop.f32.mrb[0].mxu0
    %191 = vdwg.mxu0
    %192 = vmatprep.subr.bf16.mxu0 %v149
    %193 = vmatpush1.bf16.msra.mxu0 %v146
    %194 = vmatprep.subr.bf16.mxu0 0
    %195 = vmatpush1.bf16.msra.mxu0 0
    %196 = vmatprep.subr.bf16.mxu0 0
    %197 = vmatpush1.bf16.msra.mxu0 0
    %198 = vmatprep.subr.bf16.mxu0 0
    %199 = vmatpush1.bf16.msra.mxu0 0
    %200 = vmatprep.subr.bf16.mxu0 0
    %201 = vmatpush1.bf16.msra.mxu0 0
    %202 = vmatprep.subr.bf16.mxu0 0
    %203 = vmatpush1.bf16.msra.mxu0 0
    %204 = vmatprep.subr.bf16.mxu0 0
    %205 = vmatpush1.bf16.msra.mxu0 0
    %206 = vmatprep.subr.bf16.mxu0 0
    %207 = vmatpush1.bf16.msra.mxu0 0
    %208 = vmatprep.subr.bf16.mxu0 0
    %209 = vmatpush1.bf16.msra.mxu0 0
    %210 = vmatprep.subr.bf16.mxu0 0
    %211 = vmatpush1.bf16.msra.mxu0 0
    %212 = vmatprep.subr.bf16.mxu0 0
    %213 = vmatpush1.bf16.msra.mxu0 0
    %214 = vmatprep.subr.bf16.mxu0 0
    %215 = vmatpush1.bf16.msra.mxu0 0
    %216 = vmatprep.subr.bf16.mxu0 0
    %217 = vmatpush1.bf16.msra.mxu0 0
    %218 = vmatprep.subr.bf16.mxu0 0
    %219 = vmatpush1.bf16.msra.mxu0 0
    %220 = vmatprep.subr.bf16.mxu0 0
    %221 = vmatpush1.bf16.msra.mxu0 0
    %222 = vmatprep.subr.bf16.mxu0 0
    %223 = vmatpush1.bf16.msra.mxu0 0
    %224 = vmatprep.mubr.bf16.mxu0 0
    %225 = vmatmul.mubr.bf16.gmra.mrb[0].mxu0 %v136
    %v226 = vpop.f32.mrb[0].mxu0
    %v227 = vadd.f32 %v115, %v226
    %v228 = vpop.f32.mrb[0].mxu0
    %v229 = vadd.f32 %v119, %v228
    %v230 = vpop.f32.mrb[0].mxu0
    %v231 = vpop.f32.mrb[0].mxu0
    %232 = vdwg.mxu0
    %v233 = vmax.f32 %v186, 0.0
    %v234 = vmax.f32 %v188, 0.0
    %v235 = vmax.f32 %v227, 0.0
    %v236 = vmax.f32 %v229, 0.0
    %v237 = vpack.c.bf16 %v233, %v233
    %v238 = vpack.c.bf16 %v234, %v234
    %v239 = vpack.c.bf16 %v235, %v235
    %v240 = vpack.c.bf16 %v236, %v236
    %v241 = vld [vmem:[#allocation7] sm:$0xff]
    %v242 = vld [vmem:[#allocation7 + $0x8] sm:$0xf]
    %v243 = vld [vmem:[#allocation7 + $0xc] sm:$0xff]
    %v244 = vld [vmem:[#allocation7 + $0x14] sm:$0xf]
    %v245 = vld [vmem:[#allocation7 + $0x18] sm:$0xff]
    %v246 = vld [vmem:[#allocation7 + $0x20] sm:$0xf]
    %v247 = vld [vmem:[#allocation7 + $0x24] sm:$0xff]
    %v248 = vld [vmem:[#allocation7 + $0x2c] sm:$0xf]
    %v249 = vld [vmem:[#allocation7 + $0x30] sm:$0xff]
    %v250 = vld [vmem:[#allocation7 + $0x38] sm:$0xf]
    %v251 = vld [vmem:[#allocation7 + $0x3c] sm:$0xff]
    %v252 = vld [vmem:[#allocation7 + $0x44] sm:$0xf]
    %v253 = vld [vmem:[#allocation7 + $0x48] sm:$0xff]
    %v254 = vld [vmem:[#allocation7 + $0x50] sm:$0xf]
    %v255 = vld [vmem:[#allocation7 + $0x54] sm:$0xff]
    %v256 = vld [vmem:[#allocation7 + $0x5c] sm:$0xf]
    %v257 = vld [vmem:[#allocation7 + $0x60] sm:$0xff]
    %v258 = vld [vmem:[#allocation7 + $0x68] sm:$0xf]
    %v259 = vld [vmem:[#allocation7 + $0x6c] sm:$0xff]
    %v260 = vld [vmem:[#allocation7 + $0x74] sm:$0xf]
    %v261 = vld [vmem:[#allocation7 + $0x78] sm:$0xff]
    %v262 = vld [vmem:[#allocation7 + $0x80] sm:$0xf]
    %v263 = vld [vmem:[#allocation7 + $0x84] sm:$0xff]
    %v264 = vld [vmem:[#allocation7 + $0x8c] sm:$0xf]
    %v265 = vld [vmem:[#allocation7 + $0x90] sm:$0xff]
    %v266 = vld [vmem:[#allocation7 + $0x98] sm:$0xf]
    %v267 = vld [vmem:[#allocation7 + $0x9c] sm:$0xff]
    %v268 = vld [vmem:[#allocation7 + $0xa4] sm:$0xf]
    %v269 = vld [vmem:[#allocation7 + $0xa8] sm:$0xff]
    %v270 = vld [vmem:[#allocation7 + $0xb0] sm:$0xf]
    %v271 = vld [vmem:[#allocation7 + $0xb4] sm:$0xff]
    %v272 = vld [vmem:[#allocation7 + $0xbc] sm:$0xf]
    %v273 = vld [vmem:[#allocation7 + $0xc0] sm:$0xff]
    %v274 = vld [vmem:[#allocation7 + $0xc8] sm:$0xf]
    %v275 = vld [vmem:[#allocation7 + $0xcc] sm:$0xff]
    %v276 = vld [vmem:[#allocation7 + $0xd4] sm:$0xf]
    %v277 = vld [vmem:[#allocation7 + $0xd8] sm:$0xff]
    %v278 = vld [vmem:[#allocation7 + $0xe0] sm:$0xf]
    %v279 = vld [vmem:[#allocation7 + $0xe4] sm:$0xff]
    %v280 = vld [vmem:[#allocation7 + $0xec] sm:$0xf]
    %v281 = vld [vmem:[#allocation7 + $0xf0] sm:$0xff]
    %v282 = vld [vmem:[#allocation7 + $0xf8] sm:$0xf]
    %v283 = vld [vmem:[#allocation7 + $0xfc] sm:$0xff]
    %v284 = vld [vmem:[#allocation7 + $0x104] sm:$0xf]
    %v285 = vld [vmem:[#allocation7 + $0x108] sm:$0xff]
    %v286 = vld [vmem:[#allocation7 + $0x110] sm:$0xf]
    %v287 = vld [vmem:[#allocation7 + $0x114] sm:$0xff]
    %v288 = vld [vmem:[#allocation7 + $0x11c] sm:$0xf]
    %v289 = vld [vmem:[#allocation7 + $0x120] sm:$0xff]
    %v290 = vld [vmem:[#allocation7 + $0x128] sm:$0xf]
    %v291 = vld [vmem:[#allocation7 + $0x12c] sm:$0xff]
    %v292 = vld [vmem:[#allocation7 + $0x134] sm:$0xf]
    %v293 = vld [vmem:[#allocation7 + $0x138] sm:$0xff]
    %v294 = vld [vmem:[#allocation7 + $0x140] sm:$0xf]
    %v295 = vld [vmem:[#allocation7 + $0x144] sm:$0xff]
    %v296 = vld [vmem:[#allocation7 + $0x14c] sm:$0xf]
    %v297 = vld [vmem:[#allocation7 + $0x150] sm:$0xff]
    %v298 = vld [vmem:[#allocation7 + $0x158] sm:$0xf]
    %v299 = vld [vmem:[#allocation7 + $0x15c] sm:$0xff]
    %v300 = vld [vmem:[#allocation7 + $0x164] sm:$0xf]
    %v301 = vld [vmem:[#allocation7 + $0x168] sm:$0xff]
    %v302 = vld [vmem:[#allocation7 + $0x170] sm:$0xf]
    %v303 = vld [vmem:[#allocation7 + $0x174] sm:$0xff]
    %v304 = vld [vmem:[#allocation7 + $0x17c] sm:$0xf]
    %v305 = vld [vmem:[#allocation7 + $0x180] sm:$0xff]
    %v306 = vld [vmem:[#allocation7 + $0x188] sm:$0xf]
    %v307 = vld [vmem:[#allocation7 + $0x18c] sm:$0xff]
    %v308 = vld [vmem:[#allocation7 + $0x194] sm:$0xf]
    %v309 = vld [vmem:[#allocation7 + $0x198] sm:$0xff]
    %v310 = vld [vmem:[#allocation7 + $0x1a0] sm:$0xf]
    %v311 = vld [vmem:[#allocation7 + $0x1a4] sm:$0xff]
    %v312 = vld [vmem:[#allocation7 + $0x1ac] sm:$0xf]
    %v313 = vld [vmem:[#allocation7 + $0x1b0] sm:$0xff]
    %v314 = vld [vmem:[#allocation7 + $0x1b8] sm:$0xf]
    %v315 = vld [vmem:[#allocation7 + $0x1bc] sm:$0xff]
    %v316 = vld [vmem:[#allocation7 + $0x1c4] sm:$0xf]
    %v317 = vld [vmem:[#allocation7 + $0x1c8] sm:$0xff]
    %v318 = vld [vmem:[#allocation7 + $0x1d0] sm:$0xf]
    %v319 = vld [vmem:[#allocation7 + $0x1d4] sm:$0xff]
    %v320 = vld [vmem:[#allocation7 + $0x1dc] sm:$0xf]
    %v321 = vld [vmem:[#allocation7 + $0x1e0] sm:$0xff]
    %v322 = vld [vmem:[#allocation7 + $0x1e8] sm:$0xf]
    %v323 = vld [vmem:[#allocation7 + $0x1ec] sm:$0xff]
    %v324 = vld [vmem:[#allocation7 + $0x1f4] sm:$0xf]
    %v325 = vld [vmem:[#allocation7 + $0x1f8] sm:$0xff]
    %v326 = vld [vmem:[#allocation7 + $0x200] sm:$0xf]
    %v327 = vld [vmem:[#allocation7 + $0x204] sm:$0xff]
    %v328 = vld [vmem:[#allocation7 + $0x20c] sm:$0xf]
    %v329 = vld [vmem:[#allocation7 + $0x210] sm:$0xff]
    %v330 = vld [vmem:[#allocation7 + $0x218] sm:$0xf]
    %v331 = vld [vmem:[#allocation7 + $0x21c] sm:$0xff]
    %v332 = vld [vmem:[#allocation7 + $0x224] sm:$0xf]
    %v333 = vld [vmem:[#allocation7 + $0x228] sm:$0xff]
    %v334 = vld [vmem:[#allocation7 + $0x230] sm:$0xf]
    %v335 = vld [vmem:[#allocation7 + $0x234] sm:$0xff]
    %v336 = vld [vmem:[#allocation7 + $0x23c] sm:$0xf]
    %v337 = vld [vmem:[#allocation7 + $0x240] sm:$0xff]
    %v338 = vld [vmem:[#allocation7 + $0x248] sm:$0xf]
    %v339 = vld [vmem:[#allocation7 + $0x24c] sm:$0xff]
    %v340 = vld [vmem:[#allocation7 + $0x254] sm:$0xf]
    %v341 = vld [vmem:[#allocation7 + $0x258] sm:$0xff]
    %v342 = vld [vmem:[#allocation7 + $0x260] sm:$0xf]
    %v343 = vld [vmem:[#allocation7 + $0x264] sm:$0xff]
    %v344 = vld [vmem:[#allocation7 + $0x26c] sm:$0xf]
    %v345 = vld [vmem:[#allocation7 + $0x270] sm:$0xff]
    %v346 = vld [vmem:[#allocation7 + $0x278] sm:$0xf]
    %v347 = vld [vmem:[#allocation7 + $0x27c] sm:$0xff]
    %v348 = vld [vmem:[#allocation7 + $0x284] sm:$0xf]
    %v349 = vld [vmem:[#allocation7 + $0x288] sm:$0xff]
    %v350 = vld [vmem:[#allocation7 + $0x290] sm:$0xf]
    %v351 = vld [vmem:[#allocation7 + $0x294] sm:$0xff]
    %v352 = vld [vmem:[#allocation7 + $0x29c] sm:$0xf]
    %v353 = vld [vmem:[#allocation7 + $0x2a0] sm:$0xff]
    %v354 = vld [vmem:[#allocation7 + $0x2a8] sm:$0xf]
    %v355 = vld [vmem:[#allocation7 + $0x2ac] sm:$0xff]
    %v356 = vld [vmem:[#allocation7 + $0x2b4] sm:$0xf]
    %v357 = vld [vmem:[#allocation7 + $0x2b8] sm:$0xff]
    %v358 = vld [vmem:[#allocation7 + $0x2c0] sm:$0xf]
    %v359 = vld [vmem:[#allocation7 + $0x2c4] sm:$0xff]
    %v360 = vld [vmem:[#allocation7 + $0x2cc] sm:$0xf]
    %v361 = vld [vmem:[#allocation7 + $0x2d0] sm:$0xff]
    %v362 = vld [vmem:[#allocation7 + $0x2d8] sm:$0xf]
    %v363 = vld [vmem:[#allocation7 + $0x2dc] sm:$0xff]
    %v364 = vld [vmem:[#allocation7 + $0x2e4] sm:$0xf]
    %v365 = vld [vmem:[#allocation7 + $0x2e8] sm:$0xff]
    %v366 = vld [vmem:[#allocation7 + $0x2f0] sm:$0xf]
    %v367 = vld [vmem:[#allocation7 + $0x2f4] sm:$0xff]
    %v368 = vld [vmem:[#allocation7 + $0x2fc] sm:$0xf]
    %v369 = vld [vmem:[%s4] sm:$0x7]
    %v371 = vlaneseq
    %v372 = vshrl.u32 %v371, 7
    %v373 = vsub.s32 0, %v372
    %v374 = vrot.slane %v369, %v373
    %v375 = vlaneseq
    %v376 = vshrl.u32 %v375, 7
    %v377 = vsub.s32 1, %v376
    %v378 = vrot.slane %v369, %v377
    %v379 = vlaneseq
    %v380 = vshrl.u32 %v379, 7
    %v381 = vsub.s32 2, %v380
    %v382 = vrot.slane %v369, %v381
    %v514 = vunpack.c.l.b16 %v241
    %v515 = vunpack.c.h.b16 %v241
    %v516 = vunpack.c.l.b16 %v242
    %v517 = vunpack.c.l.b16 %v243
    %v518 = vunpack.c.h.b16 %v243
    %v519 = vunpack.c.l.b16 %v244
    %v520 = vunpack.c.l.b16 %v245
    %v521 = vunpack.c.h.b16 %v245
    %v522 = vunpack.c.l.b16 %v246
    %v523 = vunpack.c.l.b16 %v247
    %v524 = vunpack.c.h.b16 %v247
    %v525 = vunpack.c.l.b16 %v248
    %v526 = vunpack.c.l.b16 %v249
    %v527 = vunpack.c.h.b16 %v249
    %v528 = vunpack.c.l.b16 %v250
    %v529 = vunpack.c.l.b16 %v251
    %v530 = vunpack.c.h.b16 %v251
    %v531 = vunpack.c.l.b16 %v252
    %v532 = vunpack.c.l.b16 %v253
    %v533 = vunpack.c.h.b16 %v253
    %v534 = vunpack.c.l.b16 %v254
    %v535 = vunpack.c.l.b16 %v255
    %v536 = vunpack.c.h.b16 %v255
    %v537 = vunpack.c.l.b16 %v256
    %v538 = vunpack.c.l.b16 %v257
    %v539 = vunpack.c.h.b16 %v257
    %v540 = vunpack.c.l.b16 %v258
    %v541 = vunpack.c.l.b16 %v259
    %v542 = vunpack.c.h.b16 %v259
    %v543 = vunpack.c.l.b16 %v260
    %v544 = vunpack.c.l.b16 %v261
    %v545 = vunpack.c.h.b16 %v261
    %v546 = vunpack.c.l.b16 %v262
    %v547 = vunpack.c.l.b16 %v263
    %v548 = vunpack.c.h.b16 %v263
    %v549 = vunpack.c.l.b16 %v264
    %v550 = vunpack.c.l.b16 %v265
    %v551 = vunpack.c.h.b16 %v265
    %v552 = vunpack.c.l.b16 %v266
    %v553 = vunpack.c.l.b16 %v267
    %v554 = vunpack.c.h.b16 %v267
    %v555 = vunpack.c.l.b16 %v268
    %v556 = vunpack.c.l.b16 %v269
    %v557 = vunpack.c.h.b16 %v269
    %v558 = vunpack.c.l.b16 %v270
    %v559 = vunpack.c.l.b16 %v271
    %v560 = vunpack.c.h.b16 %v271
    %v561 = vunpack.c.l.b16 %v272
    %v562 = vunpack.c.l.b16 %v273
    %v563 = vunpack.c.h.b16 %v273
    %v564 = vunpack.c.l.b16 %v274
    %v565 = vunpack.c.l.b16 %v275
    %v566 = vunpack.c.h.b16 %v275
    %v567 = vunpack.c.l.b16 %v276
    %v568 = vunpack.c.l.b16 %v277
    %v569 = vunpack.c.h.b16 %v277
    %v570 = vunpack.c.l.b16 %v278
    %v571 = vunpack.c.l.b16 %v279
    %v572 = vunpack.c.h.b16 %v279
    %v573 = vunpack.c.l.b16 %v280
    %v574 = vunpack.c.l.b16 %v281
    %v575 = vunpack.c.h.b16 %v281
    %v576 = vunpack.c.l.b16 %v282
    %v577 = vunpack.c.l.b16 %v283
    %v578 = vunpack.c.h.b16 %v283
    %v579 = vunpack.c.l.b16 %v284
    %v580 = vunpack.c.l.b16 %v285
    %v581 = vunpack.c.h.b16 %v285
    %v582 = vunpack.c.l.b16 %v286
    %v583 = vunpack.c.l.b16 %v287
    %v584 = vunpack.c.h.b16 %v287
    %v585 = vunpack.c.l.b16 %v288
    %v586 = vunpack.c.l.b16 %v289
    %v587 = vunpack.c.h.b16 %v289
    %v588 = vunpack.c.l.b16 %v290
    %v589 = vunpack.c.l.b16 %v291
    %v590 = vunpack.c.h.b16 %v291
    %v591 = vunpack.c.l.b16 %v292
    %v592 = vunpack.c.l.b16 %v293
    %v593 = vunpack.c.h.b16 %v293
    %v594 = vunpack.c.l.b16 %v294
    %v595 = vunpack.c.l.b16 %v295
    %v596 = vunpack.c.h.b16 %v295
    %v597 = vunpack.c.l.b16 %v296
    %v598 = vunpack.c.l.b16 %v297
    %v599 = vunpack.c.h.b16 %v297
    %v600 = vunpack.c.l.b16 %v298
    %v601 = vunpack.c.l.b16 %v299
    %v602 = vunpack.c.h.b16 %v299
    %v603 = vunpack.c.l.b16 %v300
    %v604 = vunpack.c.l.b16 %v301
    %v605 = vunpack.c.h.b16 %v301
    %v606 = vunpack.c.l.b16 %v302
    %v607 = vunpack.c.l.b16 %v303
    %v608 = vunpack.c.h.b16 %v303
    %v609 = vunpack.c.l.b16 %v304
    %v610 = vunpack.c.l.b16 %v305
    %v611 = vunpack.c.h.b16 %v305
    %v612 = vunpack.c.l.b16 %v306
    %v613 = vunpack.c.l.b16 %v307
    %v614 = vunpack.c.h.b16 %v307
    %v615 = vunpack.c.l.b16 %v308
    %v616 = vunpack.c.l.b16 %v309
    %v617 = vunpack.c.h.b16 %v309
    %v618 = vunpack.c.l.b16 %v310
    %v619 = vunpack.c.l.b16 %v311
    %v620 = vunpack.c.h.b16 %v311
    %v621 = vunpack.c.l.b16 %v312
    %v622 = vunpack.c.l.b16 %v313
    %v623 = vunpack.c.h.b16 %v313
    %v624 = vunpack.c.l.b16 %v314
    %v625 = vunpack.c.l.b16 %v315
    %v626 = vunpack.c.h.b16 %v315
    %v627 = vunpack.c.l.b16 %v316
    %v628 = vunpack.c.l.b16 %v317
    %v629 = vunpack.c.h.b16 %v317
    %v630 = vunpack.c.l.b16 %v318
    %v631 = vunpack.c.l.b16 %v319
    %v632 = vunpack.c.h.b16 %v319
    %v633 = vunpack.c.l.b16 %v320
    %v634 = vunpack.c.l.b16 %v321
    %v635 = vunpack.c.h.b16 %v321
    %v636 = vunpack.c.l.b16 %v322
    %v637 = vunpack.c.l.b16 %v323
    %v638 = vunpack.c.h.b16 %v323
    %v639 = vunpack.c.l.b16 %v324
    %v640 = vunpack.c.l.b16 %v325
    %v641 = vunpack.c.h.b16 %v325
    %v642 = vunpack.c.l.b16 %v326
    %v643 = vunpack.c.l.b16 %v327
    %v644 = vunpack.c.h.b16 %v327
    %v645 = vunpack.c.l.b16 %v328
    %v646 = vunpack.c.l.b16 %v329
    %v647 = vunpack.c.h.b16 %v329
    %v648 = vunpack.c.l.b16 %v330
    %v649 = vunpack.c.l.b16 %v331
    %v650 = vunpack.c.h.b16 %v331
    %v651 = vunpack.c.l.b16 %v332
    %v652 = vunpack.c.l.b16 %v333
    %v653 = vunpack.c.h.b16 %v333
    %v654 = vunpack.c.l.b16 %v334
    %v655 = vunpack.c.l.b16 %v335
    %v656 = vunpack.c.h.b16 %v335
    %v657 = vunpack.c.l.b16 %v336
    %v658 = vunpack.c.l.b16 %v337
    %v659 = vunpack.c.h.b16 %v337
    %v660 = vunpack.c.l.b16 %v338
    %v661 = vunpack.c.l.b16 %v339
    %v662 = vunpack.c.h.b16 %v339
    %v663 = vunpack.c.l.b16 %v340
    %v664 = vunpack.c.l.b16 %v341
    %v665 = vunpack.c.h.b16 %v341
    %v666 = vunpack.c.l.b16 %v342
    %v667 = vunpack.c.l.b16 %v343
    %v668 = vunpack.c.h.b16 %v343
    %v669 = vunpack.c.l.b16 %v344
    %v670 = vunpack.c.l.b16 %v345
    %v671 = vunpack.c.h.b16 %v345
    %v672 = vunpack.c.l.b16 %v346
    %v673 = vunpack.c.l.b16 %v347
    %v674 = vunpack.c.h.b16 %v347
    %v675 = vunpack.c.l.b16 %v348
    %v676 = vunpack.c.l.b16 %v349
    %v677 = vunpack.c.h.b16 %v349
    %v678 = vunpack.c.l.b16 %v350
    %v679 = vunpack.c.l.b16 %v351
    %v680 = vunpack.c.h.b16 %v351
    %v681 = vunpack.c.l.b16 %v352
    %v682 = vunpack.c.l.b16 %v353
    %v683 = vunpack.c.h.b16 %v353
    %v684 = vunpack.c.l.b16 %v354
    %v685 = vunpack.c.l.b16 %v355
    %v686 = vunpack.c.h.b16 %v355
    %v687 = vunpack.c.l.b16 %v356
    %v688 = vunpack.c.l.b16 %v357
    %v689 = vunpack.c.h.b16 %v357
    %v690 = vunpack.c.l.b16 %v358
    %v691 = vunpack.c.l.b16 %v359
    %v692 = vunpack.c.h.b16 %v359
    %v693 = vunpack.c.l.b16 %v360
    %v694 = vunpack.c.l.b16 %v361
    %v695 = vunpack.c.h.b16 %v361
    %v696 = vunpack.c.l.b16 %v362
    %v697 = vunpack.c.l.b16 %v363
    %v698 = vunpack.c.h.b16 %v363
    %v699 = vunpack.c.l.b16 %v364
    %v700 = vunpack.c.l.b16 %v365
    %v701 = vunpack.c.h.b16 %v365
    %v702 = vunpack.c.l.b16 %v366
    %v703 = vunpack.c.l.b16 %v367
    %v704 = vunpack.c.h.b16 %v367
    %v705 = vunpack.c.l.b16 %v368
    %v706 = vpack.c.b16 %v517, %v514
    %v707 = vpack.c.b16 %v518, %v515
    %v708 = vpack.c.b16 %v519, %v516
    %v709 = vpack.c.b16 %v523, %v520
    %v710 = vpack.c.b16 %v524, %v521
    %v711 = vpack.c.b16 %v525, %v522
    %v712 = vpack.c.b16 %v529, %v526
    %v713 = vpack.c.b16 %v530, %v527
    %v714 = vpack.c.b16 %v531, %v528
    %v715 = vpack.c.b16 %v535, %v532
    %v716 = vpack.c.b16 %v536, %v533
    %v717 = vpack.c.b16 %v537, %v534
    %v718 = vpack.c.b16 %v541, %v538
    %v719 = vpack.c.b16 %v542, %v539
    %v720 = vpack.c.b16 %v543, %v540
    %v721 = vpack.c.b16 %v547, %v544
    %v722 = vpack.c.b16 %v548, %v545
    %v723 = vpack.c.b16 %v549, %v546
    %v724 = vpack.c.b16 %v553, %v550
    %v725 = vpack.c.b16 %v554, %v551
    %v726 = vpack.c.b16 %v555, %v552
    %v727 = vpack.c.b16 %v559, %v556
    %v728 = vpack.c.b16 %v560, %v557
    %v729 = vpack.c.b16 %v561, %v558
    %v730 = vpack.c.b16 %v565, %v562
    %v731 = vpack.c.b16 %v566, %v563
    %v732 = vpack.c.b16 %v567, %v564
    %v733 = vpack.c.b16 %v571, %v568
    %v734 = vpack.c.b16 %v572, %v569
    %v735 = vpack.c.b16 %v573, %v570
    %v736 = vpack.c.b16 %v577, %v574
    %v737 = vpack.c.b16 %v578, %v575
    %v738 = vpack.c.b16 %v579, %v576
    %v739 = vpack.c.b16 %v583, %v580
    %v740 = vpack.c.b16 %v584, %v581
    %v741 = vpack.c.b16 %v585, %v582
    %v742 = vpack.c.b16 %v589, %v586
    %v743 = vpack.c.b16 %v590, %v587
    %v744 = vpack.c.b16 %v591, %v588
    %v745 = vpack.c.b16 %v595, %v592
    %v746 = vpack.c.b16 %v596, %v593
    %v747 = vpack.c.b16 %v597, %v594
    %v748 = vpack.c.b16 %v601, %v598
    %v749 = vpack.c.b16 %v602, %v599
    %v750 = vpack.c.b16 %v603, %v600
    %v751 = vpack.c.b16 %v607, %v604
    %v752 = vpack.c.b16 %v608, %v605
    %v753 = vpack.c.b16 %v609, %v606
    %v754 = vpack.c.b16 %v613, %v610
    %v755 = vpack.c.b16 %v614, %v611
    %v756 = vpack.c.b16 %v615, %v612
    %v757 = vpack.c.b16 %v619, %v616
    %v758 = vpack.c.b16 %v620, %v617
    %v759 = vpack.c.b16 %v621, %v618
    %v760 = vpack.c.b16 %v625, %v622
    %v761 = vpack.c.b16 %v626, %v623
    %v762 = vpack.c.b16 %v627, %v624
    %v763 = vpack.c.b16 %v631, %v628
    %v764 = vpack.c.b16 %v632, %v629
    %v765 = vpack.c.b16 %v633, %v630
    %v766 = vpack.c.b16 %v637, %v634
    %v767 = vpack.c.b16 %v638, %v635
    %v768 = vpack.c.b16 %v639, %v636
    %v769 = vpack.c.b16 %v643, %v640
    %v770 = vpack.c.b16 %v644, %v641
    %v771 = vpack.c.b16 %v645, %v642
    %v772 = vpack.c.b16 %v649, %v646
    %v773 = vpack.c.b16 %v650, %v647
    %v774 = vpack.c.b16 %v651, %v648
    %v775 = vpack.c.b16 %v655, %v652
    %v776 = vpack.c.b16 %v656, %v653
    %v777 = vpack.c.b16 %v657, %v654
    %v778 = vpack.c.b16 %v661, %v658
    %v779 = vpack.c.b16 %v662, %v659
    %v780 = vpack.c.b16 %v663, %v660
    %v781 = vpack.c.b16 %v667, %v664
    %v782 = vpack.c.b16 %v668, %v665
    %v783 = vpack.c.b16 %v669, %v666
    %v784 = vpack.c.b16 %v673, %v670
    %v785 = vpack.c.b16 %v674, %v671
    %v786 = vpack.c.b16 %v675, %v672
    %v787 = vpack.c.b16 %v679, %v676
    %v788 = vpack.c.b16 %v680, %v677
    %v789 = vpack.c.b16 %v681, %v678
    %v790 = vpack.c.b16 %v685, %v682
    %v791 = vpack.c.b16 %v686, %v683
    %v792 = vpack.c.b16 %v687, %v684
    %v793 = vpack.c.b16 %v691, %v688
    %v794 = vpack.c.b16 %v692, %v689
    %v795 = vpack.c.b16 %v693, %v690
    %v796 = vpack.c.b16 %v697, %v694
    %v797 = vpack.c.b16 %v698, %v695
    %v798 = vpack.c.b16 %v699, %v696
    %v799 = vpack.c.b16 %v703, %v700
    %v800 = vpack.c.b16 %v704, %v701
    %v801 = vpack.c.b16 %v705, %v702
    %898 = vmatprep.subr.bf16.mxu0 %v707
    %899 = vmatpush1.bf16.msra.mxu0 %v706
    %900 = vmatprep.subr.bf16.mxu0 %v710
    %901 = vmatpush1.bf16.msra.mxu0 %v709
    %902 = vmatprep.subr.bf16.mxu0 %v713
    %903 = vmatpush1.bf16.msra.mxu0 %v712
    %904 = vmatprep.subr.bf16.mxu0 %v716
    %905 = vmatpush1.bf16.msra.mxu0 %v715
    %906 = vmatprep.subr.bf16.mxu0 %v719
    %907 = vmatpush1.bf16.msra.mxu0 %v718
    %908 = vmatprep.subr.bf16.mxu0 %v722
    %909 = vmatpush1.bf16.msra.mxu0 %v721
    %910 = vmatprep.subr.bf16.mxu0 %v725
    %911 = vmatpush1.bf16.msra.mxu0 %v724
    %912 = vmatprep.subr.bf16.mxu0 %v728
    %913 = vmatpush1.bf16.msra.mxu0 %v727
    %914 = vmatprep.subr.bf16.mxu0 %v731
    %915 = vmatpush1.bf16.msra.mxu0 %v730
    %916 = vmatprep.subr.bf16.mxu0 %v734
    %917 = vmatpush1.bf16.msra.mxu0 %v733
    %918 = vmatprep.subr.bf16.mxu0 %v737
    %919 = vmatpush1.bf16.msra.mxu0 %v736
    %920 = vmatprep.subr.bf16.mxu0 %v740
    %921 = vmatpush1.bf16.msra.mxu0 %v739
    %922 = vmatprep.subr.bf16.mxu0 %v743
    %923 = vmatpush1.bf16.msra.mxu0 %v742
    %924 = vmatprep.subr.bf16.mxu0 %v746
    %925 = vmatpush1.bf16.msra.mxu0 %v745
    %926 = vmatprep.subr.bf16.mxu0 %v749
    %927 = vmatpush1.bf16.msra.mxu0 %v748
    %928 = vmatprep.subr.bf16.mxu0 %v752
    %929 = vmatpush1.bf16.msra.mxu0 %v751
    %930 = vmatprep.mubr.bf16.mxu0 %v238
    %931 = vmatmul.mubr.bf16.gmra.mrb[0].mxu0 %v237
    %v932 = vpop.f32.mrb[0].mxu0
    %v933 = vadd.f32 %v374, %v932
    %v934 = vpop.f32.mrb[0].mxu0
    %v935 = vadd.f32 %v378, %v934
    %v936 = vpop.f32.mrb[0].mxu0
    %v937 = vpop.f32.mrb[0].mxu0
    %938 = vdwg.mxu0
    %939 = vmatprep.subr.bf16.mxu0 %v755
    %940 = vmatpush1.bf16.msra.mxu0 %v754
    %941 = vmatprep.subr.bf16.mxu0 %v758
    %942 = vmatpush1.bf16.msra.mxu0 %v757
    %943 = vmatprep.subr.bf16.mxu0 %v761
    %944 = vmatpush1.bf16.msra.mxu0 %v760
    %945 = vmatprep.subr.bf16.mxu0 %v764
    %946 = vmatpush1.bf16.msra.mxu0 %v763
    %947 = vmatprep.subr.bf16.mxu0 %v767
    %948 = vmatpush1.bf16.msra.mxu0 %v766
    %949 = vmatprep.subr.bf16.mxu0 %v770
    %950 = vmatpush1.bf16.msra.mxu0 %v769
    %951 = vmatprep.subr.bf16.mxu0 %v773
    %952 = vmatpush1.bf16.msra.mxu0 %v772
    %953 = vmatprep.subr.bf16.mxu0 %v776
    %954 = vmatpush1.bf16.msra.mxu0 %v775
    %955 = vmatprep.subr.bf16.mxu0 %v779
    %956 = vmatpush1.bf16.msra.mxu0 %v778
    %957 = vmatprep.subr.bf16.mxu0 %v782
    %958 = vmatpush1.bf16.msra.mxu0 %v781
    %959 = vmatprep.subr.bf16.mxu0 %v785
    %960 = vmatpush1.bf16.msra.mxu0 %v784
    %961 = vmatprep.subr.bf16.mxu0 %v788
    %962 = vmatpush1.bf16.msra.mxu0 %v787
    %963 = vmatprep.subr.bf16.mxu0 %v791
    %964 = vmatpush1.bf16.msra.mxu0 %v790
    %965 = vmatprep.subr.bf16.mxu0 %v794
    %966 = vmatpush1.bf16.msra.mxu0 %v793
    %967 = vmatprep.subr.bf16.mxu0 %v797
    %968 = vmatpush1.bf16.msra.mxu0 %v796
    %969 = vmatprep.subr.bf16.mxu0 %v800
    %970 = vmatpush1.bf16.msra.mxu0 %v799
    %971 = vmatprep.mubr.bf16.mxu0 %v240
    %972 = vmatmul.mubr.bf16.gmra.mrb[0].mxu0 %v239
    %v973 = vpop.f32.mrb[0].mxu0
    %v974 = vadd.f32 %v933, %v973
    %v975 = vpop.f32.mrb[0].mxu0
    %v976 = vadd.f32 %v935, %v975
    %v977 = vpop.f32.mrb[0].mxu0
    %v978 = vpop.f32.mrb[0].mxu0
    %979 = vdwg.mxu0
    %980 = vmatprep.subr.bf16.mxu0 0
    %981 = vmatpush1.bf16.msra.mxu0 %v708
    %982 = vmatprep.subr.bf16.mxu0 0
    %983 = vmatpush1.bf16.msra.mxu0 %v711
    %984 = vmatprep.subr.bf16.mxu0 0
    %985 = vmatpush1.bf16.msra.mxu0 %v714
    %986 = vmatprep.subr.bf16.mxu0 0
    %987 = vmatpush1.bf16.msra.mxu0 %v717
    %988 = vmatprep.subr.bf16.mxu0 0
    %989 = vmatpush1.bf16.msra.mxu0 %v720
    %990 = vmatprep.subr.bf16.mxu0 0
    %991 = vmatpush1.bf16.msra.mxu0 %v723
    %992 = vmatprep.subr.bf16.mxu0 0
    %993 = vmatpush1.bf16.msra.mxu0 %v726
    %994 = vmatprep.subr.bf16.mxu0 0
    %995 = vmatpush1.bf16.msra.mxu0 %v729
    %996 = vmatprep.subr.bf16.mxu0 0
    %997 = vmatpush1.bf16.msra.mxu0 %v732
    %998 = vmatprep.subr.bf16.mxu0 0
    %999 = vmatpush1.bf16.msra.mxu0 %v735
    %1000 = vmatprep.subr.bf16.mxu0 0
    %1001 = vmatpush1.bf16.msra.mxu0 %v738
    %1002 = vmatprep.subr.bf16.mxu0 0
    %1003 = vmatpush1.bf16.msra.mxu0 %v741
    %1004 = vmatprep.subr.bf16.mxu0 0
    %1005 = vmatpush1.bf16.msra.mxu0 %v744
    %1006 = vmatprep.subr.bf16.mxu0 0
    %1007 = vmatpush1.bf16.msra.mxu0 %v747
    %1008 = vmatprep.subr.bf16.mxu0 0
    %1009 = vmatpush1.bf16.msra.mxu0 %v750
    %1010 = vmatprep.subr.bf16.mxu0 0
    %1011 = vmatpush1.bf16.msra.mxu0 %v753
    %1012 = vmatprep.mubr.bf16.mxu0 %v238
    %1013 = vmatmul.mubr.bf16.gmra.mrb[0].mxu0 %v237
    %v1014 = vpop.f32.mrb[0].mxu0
    %v1015 = vadd.f32 %v382, %v1014
    %v1016 = vpop.f32.mrb[0].mxu0
    %v1017 = vpop.f32.mrb[0].mxu0
    %v1018 = vpop.f32.mrb[0].mxu0
    %1019 = vdwg.mxu0
    %1020 = vmatprep.subr.bf16.mxu0 0
    %1021 = vmatpush1.bf16.msra.mxu0 %v756
    %1022 = vmatprep.subr.bf16.mxu0 0
    %1023 = vmatpush1.bf16.msra.mxu0 %v759
    %1024 = vmatprep.subr.bf16.mxu0 0
    %1025 = vmatpush1.bf16.msra.mxu0 %v762
    %1026 = vmatprep.subr.bf16.mxu0 0
    %1027 = vmatpush1.bf16.msra.mxu0 %v765
    %1028 = vmatprep.subr.bf16.mxu0 0
    %1029 = vmatpush1.bf16.msra.mxu0 %v768
    %1030 = vmatprep.subr.bf16.mxu0 0
    %1031 = vmatpush1.bf16.msra.mxu0 %v771
    %1032 = vmatprep.subr.bf16.mxu0 0
    %1033 = vmatpush1.bf16.msra.mxu0 %v774
    %1034 = vmatprep.subr.bf16.mxu0 0
    %1035 = vmatpush1.bf16.msra.mxu0 %v777
    %1036 = vmatprep.subr.bf16.mxu0 0
    %1037 = vmatpush1.bf16.msra.mxu0 %v780
    %1038 = vmatprep.subr.bf16.mxu0 0
    %1039 = vmatpush1.bf16.msra.mxu0 %v783
    %1040 = vmatprep.subr.bf16.mxu0 0
    %1041 = vmatpush1.bf16.msra.mxu0 %v786
    %1042 = vmatprep.subr.bf16.mxu0 0
    %1043 = vmatpush1.bf16.msra.mxu0 %v789
    %1044 = vmatprep.subr.bf16.mxu0 0
    %1045 = vmatpush1.bf16.msra.mxu0 %v792
    %1046 = vmatprep.subr.bf16.mxu0 0
    %1047 = vmatpush1.bf16.msra.mxu0 %v795
    %1048 = vmatprep.subr.bf16.mxu0 0
    %1049 = vmatpush1.bf16.msra.mxu0 %v798
    %1050 = vmatprep.subr.bf16.mxu0 0
    %1051 = vmatpush1.bf16.msra.mxu0 %v801
    %1052 = vmatprep.mubr.bf16.mxu0 %v240
    %1053 = vmatmul.mubr.bf16.gmra.mrb[0].mxu0 %v239
    %v1054 = vpop.f32.mrb[0].mxu0
    %v1055 = vadd.f32 %v1015, %v1054
    %v1056 = vpop.f32.mrb[0].mxu0
    %v1057 = vpop.f32.mrb[0].mxu0
    %v1058 = vpop.f32.mrb[0].mxu0
    %1059 = vdwg.mxu0
    %v1060 = vmax.f32 %v974, 0.0
    %v1061 = vmax.f32 %v976, 0.0
    %v1062 = vmax.f32 %v1055, 0.0
    %v1063 = vpack.c.bf16 %v1060, %v1060
    %v1064 = vpack.c.bf16 %v1061, %v1061
    %v1065 = vpack.c.bf16 %v1062, %v1062
    %v1066 = vld [vmem:[#allocation8] sm:$0xf]
    %v1067 = vld [vmem:[#allocation8 + $0x4] sm:$0xf]
    %v1068 = vld [vmem:[#allocation8 + $0x8] sm:$0xf]
    %v1069 = vld [vmem:[#allocation8 + $0xc] sm:$0xf]
    %v1070 = vld [vmem:[#allocation8 + $0x10] sm:$0xf]
    %v1071 = vld [vmem:[#allocation8 + $0x14] sm:$0xf]
    %v1072 = vld [vmem:[#allocation8 + $0x18] sm:$0xf]
    %v1073 = vld [vmem:[#allocation8 + $0x1c] sm:$0xf]
    %v1074 = vld [vmem:[#allocation8 + $0x20] sm:$0xf]
    %v1075 = vld [vmem:[#allocation8 + $0x24] sm:$0xf]
    %v1076 = vld [vmem:[#allocation8 + $0x28] sm:$0xf]
    %v1077 = vld [vmem:[#allocation8 + $0x2c] sm:$0xf]
    %v1078 = vld [vmem:[#allocation8 + $0x30] sm:$0xf]
    %v1079 = vld [vmem:[#allocation8 + $0x34] sm:$0xf]
    %v1080 = vld [vmem:[#allocation8 + $0x38] sm:$0xf]
    %v1081 = vld [vmem:[#allocation8 + $0x3c] sm:$0xf]
    %v1082 = vld [vmem:[#allocation8 + $0x40] sm:$0xf]
    %v1083 = vld [vmem:[#allocation8 + $0x44] sm:$0xf]
    %v1084 = vld [vmem:[#allocation8 + $0x48] sm:$0xf]
    %v1085 = vld [vmem:[#allocation8 + $0x4c] sm:$0xf]
    %v1086 = vld [vmem:[#allocation8 + $0x50] sm:$0xf]
    %v1087 = vld [vmem:[#allocation8 + $0x54] sm:$0xf]
    %v1088 = vld [vmem:[#allocation8 + $0x58] sm:$0xf]
    %v1089 = vld [vmem:[#allocation8 + $0x5c] sm:$0xf]
    %v1090 = vld [vmem:[#allocation8 + $0x60] sm:$0xf]
    %v1091 = vld [vmem:[#allocation8 + $0x64] sm:$0xf]
    %v1092 = vld [vmem:[#allocation8 + $0x68] sm:$0xf]
    %v1093 = vld [vmem:[#allocation8 + $0x6c] sm:$0xf]
    %v1094 = vld [vmem:[#allocation8 + $0x70] sm:$0xf]
    %v1095 = vld [vmem:[#allocation8 + $0x74] sm:$0xf]
    %v1096 = vld [vmem:[#allocation8 + $0x78] sm:$0xf]
    %v1097 = vld [vmem:[#allocation8 + $0x7c] sm:$0xf]
    %v1098 = vld [vmem:[#allocation8 + $0x80] sm:$0xf]
    %v1099 = vld [vmem:[#allocation8 + $0x84] sm:$0xf]
    %v1100 = vld [vmem:[#allocation8 + $0x88] sm:$0xf]
    %v1101 = vld [vmem:[#allocation8 + $0x8c] sm:$0xf]
    %v1102 = vld [vmem:[#allocation8 + $0x90] sm:$0xf]
    %v1103 = vld [vmem:[#allocation8 + $0x94] sm:$0xf]
    %v1104 = vld [vmem:[#allocation8 + $0x98] sm:$0xf]
    %v1105 = vld [vmem:[#allocation8 + $0x9c] sm:$0xf]
    %v1106 = vld [vmem:[#allocation8 + $0xa0] sm:$0xf]
    %v1107 = vld [vmem:[#allocation8 + $0xa4] sm:$0xf]
    %v1108 = vld [vmem:[#allocation8 + $0xa8] sm:$0xf]
    %v1109 = vld [vmem:[#allocation8 + $0xac] sm:$0xf]
    %v1110 = vld [vmem:[#allocation8 + $0xb0] sm:$0xf]
    %v1111 = vld [vmem:[#allocation8 + $0xb4] sm:$0xf]
    %v1112 = vld [vmem:[#allocation8 + $0xb8] sm:$0xf]
    %v1113 = vld [vmem:[#allocation8 + $0xbc] sm:$0xf]
    %v1114 = vld [vmem:[%s6] sm:$0x1]
    %v1116 = vlaneseq
    %v1117 = vshrl.u32 %v1116, 7
    %v1118 = vsub.s32 0, %v1117
    %v1119 = vrot.slane %v1114, %v1118
    %v1169 = vunpack.c.l.b16 %v1066
    %v1170 = vunpack.c.l.b16 %v1067
    %v1171 = vunpack.c.l.b16 %v1068
    %v1172 = vunpack.c.l.b16 %v1069
    %v1173 = vunpack.c.l.b16 %v1070
    %v1174 = vunpack.c.l.b16 %v1071
    %v1175 = vunpack.c.l.b16 %v1072
    %v1176 = vunpack.c.l.b16 %v1073
    %v1177 = vunpack.c.l.b16 %v1074
    %v1178 = vunpack.c.l.b16 %v1075
    %v1179 = vunpack.c.l.b16 %v1076
    %v1180 = vunpack.c.l.b16 %v1077
    %v1181 = vunpack.c.l.b16 %v1078
    %v1182 = vunpack.c.l.b16 %v1079
    %v1183 = vunpack.c.l.b16 %v1080
    %v1184 = vunpack.c.l.b16 %v1081
    %v1185 = vunpack.c.l.b16 %v1082
    %v1186 = vunpack.c.l.b16 %v1083
    %v1187 = vunpack.c.l.b16 %v1084
    %v1188 = vunpack.c.l.b16 %v1085
    %v1189 = vunpack.c.l.b16 %v1086
    %v1190 = vunpack.c.l.b16 %v1087
    %v1191 = vunpack.c.l.b16 %v1088
    %v1192 = vunpack.c.l.b16 %v1089
    %v1193 = vunpack.c.l.b16 %v1090
    %v1194 = vunpack.c.l.b16 %v1091
    %v1195 = vunpack.c.l.b16 %v1092
    %v1196 = vunpack.c.l.b16 %v1093
    %v1197 = vunpack.c.l.b16 %v1094
    %v1198 = vunpack.c.l.b16 %v1095
    %v1199 = vunpack.c.l.b16 %v1096
    %v1200 = vunpack.c.l.b16 %v1097
    %v1201 = vunpack.c.l.b16 %v1098
    %v1202 = vunpack.c.l.b16 %v1099
    %v1203 = vunpack.c.l.b16 %v1100
    %v1204 = vunpack.c.l.b16 %v1101
    %v1205 = vunpack.c.l.b16 %v1102
    %v1206 = vunpack.c.l.b16 %v1103
    %v1207 = vunpack.c.l.b16 %v1104
    %v1208 = vunpack.c.l.b16 %v1105
    %v1209 = vunpack.c.l.b16 %v1106
    %v1210 = vunpack.c.l.b16 %v1107
    %v1211 = vunpack.c.l.b16 %v1108
    %v1212 = vunpack.c.l.b16 %v1109
    %v1213 = vunpack.c.l.b16 %v1110
    %v1214 = vunpack.c.l.b16 %v1111
    %v1215 = vunpack.c.l.b16 %v1112
    %v1216 = vunpack.c.l.b16 %v1113
    %v1217 = vpack.c.b16 %v1170, %v1169
    %v1218 = vpack.c.b16 %v1172, %v1171
    %v1219 = vpack.c.b16 %v1174, %v1173
    %v1220 = vpack.c.b16 %v1176, %v1175
    %v1221 = vpack.c.b16 %v1178, %v1177
    %v1222 = vpack.c.b16 %v1180, %v1179
    %v1223 = vpack.c.b16 %v1182, %v1181
    %v1224 = vpack.c.b16 %v1184, %v1183
    %v1225 = vpack.c.b16 %v1186, %v1185
    %v1226 = vpack.c.b16 %v1188, %v1187
    %v1227 = vpack.c.b16 %v1190, %v1189
    %v1228 = vpack.c.b16 %v1192, %v1191
    %v1229 = vpack.c.b16 %v1194, %v1193
    %v1230 = vpack.c.b16 %v1196, %v1195
    %v1231 = vpack.c.b16 %v1198, %v1197
    %v1232 = vpack.c.b16 %v1200, %v1199
    %v1233 = vpack.c.b16 %v1202, %v1201
    %v1234 = vpack.c.b16 %v1204, %v1203
    %v1235 = vpack.c.b16 %v1206, %v1205
    %v1236 = vpack.c.b16 %v1208, %v1207
    %v1237 = vpack.c.b16 %v1210, %v1209
    %v1238 = vpack.c.b16 %v1212, %v1211
    %v1239 = vpack.c.b16 %v1214, %v1213
    %v1240 = vpack.c.b16 %v1216, %v1215
    %1265 = vmatprep.subr.bf16.mxu0 0
    %1266 = vmatpush1.bf16.msra.mxu0 %v1217
    %1267 = vmatprep.subr.bf16.mxu0 0
    %1268 = vmatpush1.bf16.msra.mxu0 %v1218
    %1269 = vmatprep.subr.bf16.mxu0 0
    %1270 = vmatpush1.bf16.msra.mxu0 %v1219
    %1271 = vmatprep.subr.bf16.mxu0 0
    %1272 = vmatpush1.bf16.msra.mxu0 %v1220
    %1273 = vmatprep.subr.bf16.mxu0 0
    %1274 = vmatpush1.bf16.msra.mxu0 %v1221
    %1275 = vmatprep.subr.bf16.mxu0 0
    %1276 = vmatpush1.bf16.msra.mxu0 %v1222
    %1277 = vmatprep.subr.bf16.mxu0 0
    %1278 = vmatpush1.bf16.msra.mxu0 %v1223
    %1279 = vmatprep.subr.bf16.mxu0 0
    %1280 = vmatpush1.bf16.msra.mxu0 %v1224
    %1281 = vmatprep.subr.bf16.mxu0 0
    %1282 = vmatpush1.bf16.msra.mxu0 %v1225
    %1283 = vmatprep.subr.bf16.mxu0 0
    %1284 = vmatpush1.bf16.msra.mxu0 %v1226
    %1285 = vmatprep.subr.bf16.mxu0 0
    %1286 = vmatpush1.bf16.msra.mxu0 %v1227
    %1287 = vmatprep.subr.bf16.mxu0 0
    %1288 = vmatpush1.bf16.msra.mxu0 %v1228
    %1289 = vmatprep.subr.bf16.mxu0 0
    %1290 = vmatpush1.bf16.msra.mxu0 %v1229
    %1291 = vmatprep.subr.bf16.mxu0 0
    %1292 = vmatpush1.bf16.msra.mxu0 %v1230
    %1293 = vmatprep.subr.bf16.mxu0 0
    %1294 = vmatpush1.bf16.msra.mxu0 %v1231
    %1295 = vmatprep.subr.bf16.mxu0 0
    %1296 = vmatpush1.bf16.msra.mxu0 %v1232
    %1297 = vmatprep.mubr.bf16.mxu0 %v1064
    %1298 = vmatmul.mubr.bf16.gmra.mrb[0].mxu0 %v1063
    %v1299 = vpop.f32.mrb[0].mxu0
    %v1300 = vadd.f32 %v1119, %v1299
    %v1301 = vpop.f32.mrb[0].mxu0
    %v1302 = vpop.f32.mrb[0].mxu0
    %v1303 = vpop.f32.mrb[0].mxu0
    %1304 = vdwg.mxu0
    %1305 = vmatprep.subr.bf16.mxu0 0
    %1306 = vmatpush1.bf16.msra.mxu0 %v1233
    %1307 = vmatprep.subr.bf16.mxu0 0
    %1308 = vmatpush1.bf16.msra.mxu0 %v1234
    %1309 = vmatprep.subr.bf16.mxu0 0
    %1310 = vmatpush1.bf16.msra.mxu0 %v1235
    %1311 = vmatprep.subr.bf16.mxu0 0
    %1312 = vmatpush1.bf16.msra.mxu0 %v1236
    %1313 = vmatprep.subr.bf16.mxu0 0
    %1314 = vmatpush1.bf16.msra.mxu0 %v1237
    %1315 = vmatprep.subr.bf16.mxu0 0
    %1316 = vmatpush1.bf16.msra.mxu0 %v1238
    %1317 = vmatprep.subr.bf16.mxu0 0
    %1318 = vmatpush1.bf16.msra.mxu0 %v1239
    %1319 = vmatprep.subr.bf16.mxu0 0
    %1320 = vmatpush1.bf16.msra.mxu0 %v1240
    %1321 = vmatprep.subr.bf16.mxu0 0
    %1322 = vmatpush1.bf16.msra.mxu0 0
    %1323 = vmatprep.subr.bf16.mxu0 0
    %1324 = vmatpush1.bf16.msra.mxu0 0
    %1325 = vmatprep.subr.bf16.mxu0 0
    %1326 = vmatpush1.bf16.msra.mxu0 0
    %1327 = vmatprep.subr.bf16.mxu0 0
    %1328 = vmatpush1.bf16.msra.mxu0 0
    %1329 = vmatprep.subr.bf16.mxu0 0
    %1330 = vmatpush1.bf16.msra.mxu0 0
    %1331 = vmatprep.subr.bf16.mxu0 0
    %1332 = vmatpush1.bf16.msra.mxu0 0
    %1333 = vmatprep.subr.bf16.mxu0 0
    %1334 = vmatpush1.bf16.msra.mxu0 0
    %1335 = vmatprep.subr.bf16.mxu0 0
    %1336 = vmatpush1.bf16.msra.mxu0 0
    %1337 = vmatprep.mubr.bf16.mxu0 0
    %1338 = vmatmul.mubr.bf16.gmra.mrb[0].mxu0 %v1065
    %v1339 = vpop.f32.mrb[0].mxu0
    %v1340 = vadd.f32 %v1300, %v1339
    %v1341 = vpop.f32.mrb[0].mxu0
    %v1342 = vpop.f32.mrb[0].mxu0
    %v1343 = vpop.f32.mrb[0].mxu0
    %1344 = vdwg.mxu0
    %v1345 = vxor.u32 %v1340, 2147483648
    %v1346 = vmul.f32 %v1345, 1.442695
    %v1347 = vpow.pop %v1346
    %v1348 = vadd.f32 %v1347, 1.0
    %v1349 = vrcp.pop %v1348
    %v1350 = vmul.f32 1.0, %v1349
    %v1351 = vpack.c.bf16 %v1350, %v1350
    %v1352 = vld [vmem:[#allocation10] sm:$0xf]
    %v1353 = vld [vmem:[#allocation10 + $0x4] sm:$0xf]
    %v1354 = vld [vmem:[#allocation10 + $0x8] sm:$0xf]
    %v1355 = vld [vmem:[#allocation10 + $0xc] sm:$0xf]
    %v1356 = vld [vmem:[#allocation10 + $0x10] sm:$0xf]
    %v1357 = vld [vmem:[#allocation10 + $0x14] sm:$0xf]
    %v1358 = vld [vmem:[#allocation10 + $0x18] sm:$0xf]
    %v1359 = vld [vmem:[#allocation10 + $0x1c] sm:$0xf]
    %v1360 = vld [vmem:[#allocation10 + $0x20] sm:$0xf]
    %v1361 = vld [vmem:[#allocation10 + $0x24] sm:$0xf]
    %v1362 = vld [vmem:[#allocation10 + $0x28] sm:$0xf]
    %v1363 = vld [vmem:[#allocation10 + $0x2c] sm:$0xf]
    %v1364 = vld [vmem:[#allocation10 + $0x30] sm:$0xf]
    %v1365 = vld [vmem:[#allocation10 + $0x34] sm:$0xf]
    %v1366 = vld [vmem:[#allocation10 + $0x38] sm:$0xf]
    %v1367 = vld [vmem:[#allocation10 + $0x3c] sm:$0xf]
    %v1368 = vld [vmem:[%s8] sm:$0x1]
    %v1370 = vlaneseq
    %v1371 = vshrl.u32 %v1370, 7
    %v1372 = vsub.s32 0, %v1371
    %v1373 = vrot.slane %v1368, %v1372
    %v1391 = vunpack.c.l.b16 %v1352
    %v1392 = vunpack.c.l.b16 %v1353
    %v1393 = vunpack.c.l.b16 %v1354
    %v1394 = vunpack.c.l.b16 %v1355
    %v1395 = vunpack.c.l.b16 %v1356
    %v1396 = vunpack.c.l.b16 %v1357
    %v1397 = vunpack.c.l.b16 %v1358
    %v1398 = vunpack.c.l.b16 %v1359
    %v1399 = vunpack.c.l.b16 %v1360
    %v1400 = vunpack.c.l.b16 %v1361
    %v1401 = vunpack.c.l.b16 %v1362
    %v1402 = vunpack.c.l.b16 %v1363
    %v1403 = vunpack.c.l.b16 %v1364
    %v1404 = vunpack.c.l.b16 %v1365
    %v1405 = vunpack.c.l.b16 %v1366
    %v1406 = vunpack.c.l.b16 %v1367
    %v1407 = vpack.c.b16 %v1392, %v1391
    %v1408 = vpack.c.b16 %v1394, %v1393
    %v1409 = vpack.c.b16 %v1396, %v1395
    %v1410 = vpack.c.b16 %v1398, %v1397
    %v1411 = vpack.c.b16 %v1400, %v1399
    %v1412 = vpack.c.b16 %v1402, %v1401
    %v1413 = vpack.c.b16 %v1404, %v1403
    %v1414 = vpack.c.b16 %v1406, %v1405
    %1423 = vmatprep.subr.bf16.mxu0 0
    %1424 = vmatpush1.bf16.msra.mxu0 %v1407
    %1425 = vmatprep.subr.bf16.mxu0 0
    %1426 = vmatpush1.bf16.msra.mxu0 %v1408
    %1427 = vmatprep.subr.bf16.mxu0 0
    %1428 = vmatpush1.bf16.msra.mxu0 %v1409
    %1429 = vmatprep.subr.bf16.mxu0 0
    %1430 = vmatpush1.bf16.msra.mxu0 %v1410
    %1431 = vmatprep.subr.bf16.mxu0 0
    %1432 = vmatpush1.bf16.msra.mxu0 %v1411
    %1433 = vmatprep.subr.bf16.mxu0 0
    %1434 = vmatpush1.bf16.msra.mxu0 %v1412
    %1435 = vmatprep.subr.bf16.mxu0 0
    %1436 = vmatpush1.bf16.msra.mxu0 %v1413
    %1437 = vmatprep.subr.bf16.mxu0 0
    %1438 = vmatpush1.bf16.msra.mxu0 %v1414
    %1439 = vmatprep.subr.bf16.mxu0 0
    %1440 = vmatpush1.bf16.msra.mxu0 0
    %1441 = vmatprep.subr.bf16.mxu0 0
    %1442 = vmatpush1.bf16.msra.mxu0 0
    %1443 = vmatprep.subr.bf16.mxu0 0
    %1444 = vmatpush1.bf16.msra.mxu0 0
    %1445 = vmatprep.subr.bf16.mxu0 0
    %1446 = vmatpush1.bf16.msra.mxu0 0
    %1447 = vmatprep.subr.bf16.mxu0 0
    %1448 = vmatpush1.bf16.msra.mxu0 0
    %1449 = vmatprep.subr.bf16.mxu0 0
    %1450 = vmatpush1.bf16.msra.mxu0 0
    %1451 = vmatprep.subr.bf16.mxu0 0
    %1452 = vmatpush1.bf16.msra.mxu0 0
    %1453 = vmatprep.subr.bf16.mxu0 0
    %1454 = vmatpush1.bf16.msra.mxu0 0
    %1455 = vmatprep.mubr.bf16.mxu0 0
    %1456 = vmatmul.mubr.bf16.gmra.mrb[0].mxu0 %v1351
    %v1457 = vpop.f32.mrb[0].mxu0
    %v1458 = vadd.f32 %v1373, %v1457
    %v1459 = vpop.f32.mrb[0].mxu0
    %v1460 = vpop.f32.mrb[0].mxu0
    %v1461 = vpop.f32.mrb[0].mxu0
    %1462 = vdwg.mxu0
    %v1463 = vxor.u32 %v1458, 2147483648
    %v1464 = vmul.f32 %v1463, 1.442695
    %v1465 = vpow.pop %v1464
    %v1466 = vadd.f32 %v1465, 1.0
    %v1467 = vrcp.pop %v1466
    %v1468 = vmul.f32 1.0, %v1467
    %v1469 = vmul.f32 %v1468, 4.0
    %v1470 = vadd.f32 %v1469, -2.0
    %1471 = vst [vmem:[#allocation11] sm:$0xff] %v1470
    // Predicated region
    $region58: #{tpu_custom_call.1} parent=1 // pred_check
      _
    $region59: #{tpu_custom_call.1} parent=1 // pred_check_branch
      %1473 = sbr.rel (0) target = $region61
    $region60: #{tpu_custom_call.1} parent=1 // pred_region
      %s1475 = ssub.s32 128, 128
      %1476 = vsyncadd [#allocation4], %s1475
      %s1478 = sshll.u32 [#allocation11], 4
      %s1479 = int_to_ptr.vmem [resolvable:$true] %s1478
      %1481 = dma.vmem_to_hbm [thread:$0]  %s1479, 128, %s9, [#allocation4]
    $region61: #{tpu_custom_call.1} parent=1 // pred_fallthru
      _
    // Predicated region
    $region62: #{tpu_custom_call.1} parent=1 // pred_check
      _
    $region63: #{tpu_custom_call.1} parent=1 // pred_check_branch
      %1483 = sbr.rel (0) target = $region65
    $region64: #{tpu_custom_call.1} parent=1 // pred_region
      %1484 = dma.done [#allocation4], 128
    $region65: #{tpu_custom_call.1} parent=1 // pred_fallthru
      _
    %1485 = vsyncpa [#allocation3], 1
    %1486 = vsyncpa [#allocation6], 1
    %1487 = vsyncpa [#allocation9], 1
    %1488 = vsyncpa [#allocation4], 1

</llo_original>
